<compile_context>
chip_gen: v7x
topology: tpu7x:2x2x1
jax: 0.10.0
libtpu: 0.0.40
codegen_flags: <defaults>
</compile_context>

<pallas_src>
import math

import numpy as np
import jax
import jax.numpy as jnp
from jax import lax
from jax.experimental import pallas as pl
from jax.experimental.pallas import tpu as pltpu

_LANE = 128
_SUBLANE = 8
_OUT_BLOCK_TARGET = 2 * 1024 * 1024    # per-grid-step output block target (bytes)


def _round_up(x, m):
    return ((x + m - 1) // m) * m


def _vmem_limits():
    """Generation-aware (sizing_budget, mosaic_vmem_limit) in bytes."""
    cap = 0
    try:
        cap = int(getattr(pltpu.get_tpu_info(), "vmem_capacity_bytes", 0) or 0)
    except Exception:
        cap = 0
    if cap <= 0:
        cap = 64 * 1024 * 1024          # conservative fallback (v7x per-TC VMEM)
    limit = (cap * 3) // 4              # ~96 MiB on v5e/v6e, ~48 MiB on v7x
    budget = max(8 * 1024 * 1024, limit - (4 << 20))
    return budget, limit


# ----------------------------------------------------------------------------
# Kernels
# ----------------------------------------------------------------------------

def _global_kernel(x_ref, sel_ref, phase_ref, wT_ref, b_ref, o_ref):
    # x:(TM,4)  sel:(4,H)  phase:(1,H)  wT:(H,Hp)  b:(1,Hp)  o:(TM,Hp)
    omegas = jnp.dot(x_ref[...], sel_ref[...], preferred_element_type=jnp.float32)
    emb = jnp.cos(omegas + phase_ref[...])               # cos(x - pi/2) == sin(x)
    out = jnp.dot(emb.astype(wT_ref.dtype), wT_ref[...],
                  preferred_element_type=jnp.float32) + b_ref[...]
    # F.normalize(dim=-1): x / max(||x||, 1e-12)  ==  x * rsqrt(max(ss, 1e-24))
    # (padded weight columns and bias entries are exactly zero, so the norm
    #  over Hp lanes equals the norm over the real H columns)
    ss = jnp.sum(out * out, axis=-1, keepdims=True)
    o_ref[...] = (out * lax.rsqrt(jnp.maximum(ss, 1e-24))).astype(o_ref.dtype)


def _local_kernel(x_ref, wT_ref, b_ref, o_ref):
    # Pure bandwidth: (TM,4) @ (4,Hp) + bias, lane-dense store.
    out = jnp.dot(x_ref[...].astype(wT_ref.dtype), wT_ref[...],
                  preferred_element_type=jnp.float32) + b_ref[...]
    o_ref[...] = out.astype(o_ref.dtype)


# ----------------------------------------------------------------------------
# Module
# ----------------------------------------------------------------------------

class PPFStructualEmbeddingPallas:
    def __init__(self, hidden_dim, mode="local", key=None, tile_m=None,
                 use_bf16_matmul=None, out_dtype=jnp.float32):
        if mode not in ("local", "global"):
            raise ValueError("mode should be in [local, global]")
        self.mode = mode
        self.hidden_dim = hidden_dim
        self.hp = _round_up(hidden_dim, _LANE)     # lane-dense padded output width
        self.out_dtype = out_dtype
        self._out_item = int(np.dtype(out_dtype).itemsize)
        self.tile_m = tile_m
        self.vmem_budget, self.vmem_limit = _vmem_limits()
        if key is None:
            key = jax.random.PRNGKey(0)
        if use_bf16_matmul is None:
            # The MXU is bf16-native; the big H x Hp matmul (global mode) wants
            # bf16 weights.  Local mode stays f32 (tiny, mem-bound matmul).
            use_bf16_matmul = (mode == "global")

        if mode == "local":
            in_dim = 4
        else:
            if hidden_dim % 4 != 0 or (hidden_dim // 4) % 2 != 0:
                raise ValueError("global mode requires hidden_dim % 8 == 0")
            in_dim = hidden_dim
            d_model = hidden_dim // 4
            # div_term = exp(arange(0, D, 2) * (-ln(10000)/D)); each frequency
            # is repeated twice (interleaved sin/cos columns).
            div_indices = np.arange(0, d_model, 2, dtype=np.float32)
            div_term = np.exp(div_indices * (-math.log(10000.0) / d_model))
            freq_full = np.repeat(div_term, 2).astype(np.float32)          # (D,)
            # Phase trick: even columns are sin -> add -pi/2 and take cos only.
            phase = np.where(np.arange(hidden_dim) % 2 == 0,
                             -np.pi / 2.0, 0.0).astype(np.float32)
            self.phase = jnp.asarray(phase.reshape(1, hidden_dim))
            # selection matrix S: (4, H), S[q, c] = freq[c % D] iff c//D == q
            sel = np.zeros((4, hidden_dim), dtype=np.float32)
            for q in range(4):
                sel[q, q * d_model:(q + 1) * d_model] = freq_full
            self.sel = jnp.asarray(sel)

        # nn.Linear(in_dim, hidden_dim) default init: U(-1/sqrt(in), 1/sqrt(in))
        kw, kb = jax.random.split(key)
        bound = 1.0 / math.sqrt(in_dim)
        w = jax.random.uniform(kw, (hidden_dim, in_dim), jnp.float32, -bound, bound)
        b = jax.random.uniform(kb, (hidden_dim,), jnp.float32, -bound, bound)
        self.wT = jnp.asarray(w.T)        # (in_dim, H)  -- f32 reference weights
        self.b = jnp.asarray(b)           # (H,)

        # Kernel-side weights: zero-pad the output dim to Hp.  Padded columns
        # (and bias entries) stay exactly zero so the L2 norm over Hp lanes
        # equals the norm over H -- preserve this invariant if re-packing.
        wdt = jnp.bfloat16 if use_bf16_matmul else jnp.float32
        wT_pad = jnp.zeros((in_dim, self.hp), jnp.float32)
        wT_pad = wT_pad.at[:, :hidden_dim].set(self.wT)
        self.wT_k = wT_pad.astype(wdt)
        self.b_k = jnp.zeros((1, self.hp), jnp.float32).at[0, :hidden_dim].set(b)

    # ---- tiling --------------------------------------------------------
    def _pick_tile(self, n_rows):
        H, hp = self.hidden_dim, self.hp
        w_item = int(self.wT_k.dtype.itemsize)
        out_item = self._out_item
        sub = _SUBLANE if out_item >= 4 else 2 * _SUBLANE   # bf16 out: 16-row packing
        # Constants are single-buffered (pl.Buffered(1)): count the weight once.
        w_bytes = int(np.prod(self.wT_k.shape)) * w_item
        const_bytes = 2 * 8 * H * 4 + 8 * hp * 4 + (1 << 20)   # sel/phase/bias + slack
        # Per-row VMEM: double-buffered input + output blocks, plus in-kernel
        # temporaries (omegas f32, emb in weight dtype, pre-norm f32 out).
        per_row = 2 * _LANE * 4                 # (tm, 4) input, lane-padded to 128
        per_row += 2 * hp * out_item            # (tm, Hp) output block
        if self.mode == "global":
            per_row += H * 4 + H * w_item + hp * 4
        else:
            per_row += hp * 4
        avail = self.vmem_budget - w_bytes - const_bytes
        # TODO(synk): if a single-buffered bf16 (H,Hp) weight still overflows
        # VMEM (H >~ 5K on v7x), add a second grid axis over output columns with
        # a sum-of-squares scratch + @pl.when finalize instead of shrinking tm.
        cap_vmem = max(sub, (avail // per_row) // sub * sub) if avail > 0 else sub
        # Target ~2 MiB output blocks to amortize the ~0.35 us per-step overhead
        # (tm ~ 4096 at Hp=128 f32); large N then naturally yields many steps
        # for pipelining / megacore without forcing a split at small N.
        cap_blk = max(sub, (_OUT_BLOCK_TARGET // (hp * out_item)) // sub * sub)
        tm = min(cap_vmem, cap_blk, _round_up(n_rows, sub))
        if self.tile_m is not None:
            tm = min(tm, max(sub, _round_up(int(self.tile_m), sub)))
        return max(sub, tm)

    # ---- Pallas forward ------------------------------------------------
    def __call__(self, ppf):
        assert ppf.shape[-1] == 4
        lead = ppf.shape[:-1]
        N = int(np.prod(lead)) if lead else 1
        H, Hp = self.hidden_dim, self.hp

        # No row padding: the partial final row block is masked by Pallas on
        # writeback, and all per-row ops keep garbage confined to padded rows.
        x = ppf.reshape(N, 4).astype(jnp.float32)
        tm = self._pick_tile(N)
        grid_m = pl.cdiv(N, tm)

        row_spec = pl.BlockSpec((tm, 4), lambda i: (i, 0))
        out_spec = pl.BlockSpec((tm, Hp), lambda i: (i, 0))

        def const(shape):   # grid-invariant input: keep a single VMEM buffer
            return pl.BlockSpec(shape, lambda i: (0, 0), pipeline_mode=pl.Buffered(1))

        cp = pltpu.CompilerParams(dimension_semantics=("parallel",),
                                  vmem_limit_bytes=int(self.vmem_limit))
        w_bytes = int(np.prod(self.wT_k.shape)) * self.wT_k.dtype.itemsize
        out_bytes = N * Hp * self._out_item

        if self.mode == "local":
            cost = pl.CostEstimate(
                flops=2 * N * 4 * Hp + N * Hp,
                transcendentals=0,
                bytes_accessed=N * 16 + out_bytes + w_bytes + Hp * 4)
            out = pl.pallas_call(
                _local_kernel,
                out_shape=jax.ShapeDtypeStruct((N, Hp), self.out_dtype),
                grid=(grid_m,),
                in_specs=[row_spec, const((4, Hp)), const((1, Hp))],
                out_specs=out_spec,
                compiler_params=cp,
                cost_estimate=cost,
            )(x, self.wT_k, self.b_k)
        else:
            cost = pl.CostEstimate(
                flops=2 * N * H * Hp + 2 * N * 4 * H + 6 * N * Hp,
                transcendentals=N * H + N,
                bytes_accessed=N * 16 + out_bytes + w_bytes + 12 * H + 4 * Hp)
            out = pl.pallas_call(
                _global_kernel,
                out_shape=jax.ShapeDtypeStruct((N, Hp), self.out_dtype),
                grid=(grid_m,),
                in_specs=[row_spec, const((4, H)), const((1, H)),
                          const((H, Hp)), const((1, Hp))],
                out_specs=out_spec,
                compiler_params=cp,
                cost_estimate=cost,
            )(x, self.sel, self.phase, self.wT_k, self.b_k)

        if Hp != H:
            out = out[:, :H]     # extra HBM pass only when H is not lane-aligned
        return out.reshape(*lead, H)

    # ---- pure-JAX reference (mirrors the PyTorch forward) ---------------
    def reference(self, ppf):
        x = ppf.astype(jnp.float32)
        hi = jax.lax.Precision.HIGHEST
        if self.mode == "local":
            return jnp.einsum("...i,ih->...h", x, self.wT, precision=hi) + self.b
        H = self.hidden_dim
        D = H // 4
        div_indices = jnp.arange(0, D, 2, dtype=jnp.float32)
        div_term = jnp.exp(div_indices * (-math.log(10000.0) / D))

        def sin_emb(v):  # v: (...,) -> (..., D), interleaved sin/cos
            om = v[..., None] * div_term                        # (..., D/2)
            e = jnp.stack([jnp.sin(om), jnp.cos(om)], axis=-1)  # (..., D/2, 2)
            return e.reshape(*v.shape, D)

        emb = jnp.concatenate([sin_emb(x[..., k]) for k in range(4)], axis=-1)
        out = jnp.einsum("...i,ih->...h", emb, self.wT, precision=hi) + self.b
        norm = jnp.sqrt(jnp.sum(out * out, axis=-1, keepdims=True))
        return out / jnp.maximum(norm, 1e-12)


# ----------------------------------------------------------------------------
# Main
# ----------------------------------------------------------------------------

if __name__ == "__main__":
    key = jax.random.PRNGKey(0)
    k_in, k_local, k_g32, k_g512 = jax.random.split(key, 4)

    batch, seq = 2, 64                                  # N = 128 flattened rows
    ppf = jax.random.uniform(k_in, (batch, seq, 4), jnp.float32, 0.0, 3.0)

    # global mode, small hidden, f32 weights (exact-path check; lane-padded out)
    mod_g = PPFStructualEmbeddingPallas(32, mode="global", key=k_g32,
                                        use_bf16_matmul=False)
    out_g = jax.block_until_ready(mod_g(ppf))
    np.testing.assert_allclose(np.asarray(out_g), np.asarray(mod_g.reference(ppf)),
                               rtol=1e-5, atol=1e-5)
    assert out_g.shape == (batch, seq, 32)

    # global mode, lane-aligned hidden: default bf16 MXU weights + bf16 output
    mod_g2 = PPFStructualEmbeddingPallas(512, mode="global", key=k_g512,
                                         out_dtype=jnp.bfloat16)
    out_g2 = jax.block_until_ready(mod_g2(ppf))
    np.testing.assert_allclose(np.asarray(out_g2.astype(jnp.float32)),
                               np.asarray(mod_g2.reference(ppf)),
                               rtol=5e-2, atol=1e-2)
    assert out_g2.shape == (batch, seq, 512)
    assert out_g2.dtype == jnp.bfloat16

    # local mode (linear 4 -> hidden), f32
    mod_l = PPFStructualEmbeddingPallas(32, mode="local", key=k_local)
    out_l = jax.block_until_ready(mod_l(ppf))
    np.testing.assert_allclose(np.asarray(out_l), np.asarray(mod_l.reference(ppf)),
                               rtol=1e-5, atol=1e-5)
    assert out_l.shape == (batch, seq, 32)

    print("KERNEL_OK")
</pallas_src>

<mosaic_0001>
module attributes {stable_mosaic.version = 11 : i64} {
  func.func @_global_kernel(%arg0: i32, %arg1: memref<128x4xf32, #tpu.memory_space<vmem>>, %arg2: memref<4x32xf32, #tpu.memory_space<vmem>>, %arg3: memref<1x32xf32, #tpu.memory_space<vmem>>, %arg4: memref<32x128xf32, #tpu.memory_space<vmem>>, %arg5: memref<1x128xf32, #tpu.memory_space<vmem>>, %arg6: memref<128x128xf32, #tpu.memory_space<vmem>>) attributes {dimension_semantics = [#tpu.dimension_semantics<parallel>], iteration_bounds = array<i64: 1>, scalar_prefetch = 0 : i64, scratch_operands = 0 : i64, tpu.core_type = #tpu.core_type<tc>, window_params = [{transform_indices = @transform_0, window_bounds = array<i64: 128, 4>}, {pipeline_mode = #tpu.pipeline_mode<synchronous>, transform_indices = @transform_1, window_bounds = array<i64: 4, 32>}, {pipeline_mode = #tpu.pipeline_mode<synchronous>, transform_indices = @transform_2, window_bounds = array<i64: 1, 32>}, {pipeline_mode = #tpu.pipeline_mode<synchronous>, transform_indices = @transform_3, window_bounds = array<i64: 32, 128>}, {pipeline_mode = #tpu.pipeline_mode<synchronous>, transform_indices = @transform_4, window_bounds = array<i64: 1, 128>}, {transform_indices = @transform_5, window_bounds = array<i64: 128, 128>}]} {
    %c0 = arith.constant 0 : index
    %c0_0 = arith.constant 0 : index
    %0 = vector.load %arg1[%c0, %c0_0] : memref<128x4xf32, #tpu.memory_space<vmem>>, vector<128x4xf32>
    %c0_1 = arith.constant 0 : index
    %c0_2 = arith.constant 0 : index
    %1 = vector.load %arg2[%c0_1, %c0_2] : memref<4x32xf32, #tpu.memory_space<vmem>>, vector<4x32xf32>
    %cst = arith.constant dense<0.000000e+00> : vector<128x32xf32>
    %2 = tpu.matmul %0, %1, %cst {dimension_numbers = #tpu.dot_dimension_numbers<[1], [0], [0], [1], [0, 0, 1, 1], [], []>} : vector<128x4xf32>, vector<4x32xf32>, vector<128x32xf32> -> vector<128x32xf32>
    %c0_3 = arith.constant 0 : index
    %c0_4 = arith.constant 0 : index
    %3 = vector.load %arg3[%c0_3, %c0_4] : memref<1x32xf32, #tpu.memory_space<vmem>>, vector<1x32xf32>
    %4 = vector.broadcast %3 : vector<1x32xf32> to vector<128x32xf32>
    %5 = arith.addf %2, %4 : vector<128x32xf32>
    %6 = math.cos %5 : vector<128x32xf32>
    %c0_5 = arith.constant 0 : index
    %c0_6 = arith.constant 0 : index
    %7 = vector.load %arg4[%c0_5, %c0_6] : memref<32x128xf32, #tpu.memory_space<vmem>>, vector<32x128xf32>
    %cst_7 = arith.constant dense<0.000000e+00> : vector<128x128xf32>
    %8 = tpu.matmul %6, %7, %cst_7 {dimension_numbers = #tpu.dot_dimension_numbers<[1], [0], [0], [1], [0, 0, 1, 1], [], []>} : vector<128x32xf32>, vector<32x128xf32>, vector<128x128xf32> -> vector<128x128xf32>
    %c0_8 = arith.constant 0 : index
    %c0_9 = arith.constant 0 : index
    %9 = vector.load %arg5[%c0_8, %c0_9] : memref<1x128xf32, #tpu.memory_space<vmem>>, vector<1x128xf32>
    %10 = vector.broadcast %9 : vector<1x128xf32> to vector<128x128xf32>
    %11 = arith.addf %8, %10 : vector<128x128xf32>
    %12 = arith.mulf %11, %11 : vector<128x128xf32>
    %cst_10 = arith.constant dense<0.000000e+00> : vector<128xf32>
    %13 = vector.multi_reduction <add>, %12, %cst_10 [1] : vector<128x128xf32> to vector<128xf32>
    %14 = vector.shape_cast %13 : vector<128xf32> to vector<128x1xf32>
    %cst_11 = arith.constant 1.000000e-24 : f32
    %15 = vector.broadcast %cst_11 : f32 to vector<128x1xf32>
    %16 = arith.maximumf %14, %15 : vector<128x1xf32>
    %17 = math.rsqrt %16 : vector<128x1xf32>
    %18 = vector.broadcast %17 : vector<128x1xf32> to vector<128x128xf32>
    %19 = arith.mulf %11, %18 : vector<128x128xf32>
    %c0_12 = arith.constant 0 : index
    %c0_13 = arith.constant 0 : index
    %20 = vector.load %arg6[%c0_12, %c0_13] : memref<128x128xf32, #tpu.memory_space<vmem>>, vector<128x128xf32>
    tpu.vector_store %arg6[%c0_12, %c0_13], %19 {strides = array<i32>} : memref<128x128xf32, #tpu.memory_space<vmem>>, vector<128x128xf32>,
    return
  }
  func.func @transform_0(%arg0: i32) -> (i32, i32) {
    %c0_i32 = arith.constant 0 : i32
    %c0_i32_0 = arith.constant 0 : i32
    return %arg0, %c0_i32 : i32, i32
  }
  func.func @transform_1(%arg0: i32) -> (i32, i32) {
    %c0_i32 = arith.constant 0 : i32
    %c0_i32_0 = arith.constant 0 : i32
    %c0_i32_1 = arith.constant 0 : i32
    return %c0_i32, %c0_i32_0 : i32, i32
  }
  func.func @transform_2(%arg0: i32) -> (i32, i32) {
    %c0_i32 = arith.constant 0 : i32
    %c0_i32_0 = arith.constant 0 : i32
    %c0_i32_1 = arith.constant 0 : i32
    return %c0_i32, %c0_i32_0 : i32, i32
  }
  func.func @transform_3(%arg0: i32) -> (i32, i32) {
    %c0_i32 = arith.constant 0 : i32
    %c0_i32_0 = arith.constant 0 : i32
    %c0_i32_1 = arith.constant 0 : i32
    return %c0_i32, %c0_i32_0 : i32, i32
  }
  func.func @transform_4(%arg0: i32) -> (i32, i32) {
    %c0_i32 = arith.constant 0 : i32
    %c0_i32_0 = arith.constant 0 : i32
    %c0_i32_1 = arith.constant 0 : i32
    return %c0_i32, %c0_i32_0 : i32, i32
  }
  func.func @transform_5(%arg0: i32) -> (i32, i32) {
    %c0_i32 = arith.constant 0 : i32
    %c0_i32_0 = arith.constant 0 : i32
    return %arg0, %c0_i32 : i32, i32
  }
}

</mosaic_0001>

<llo_original>
// kernel: tpu_custom_call.1
$region0: #{tpu_custom_call.1}
  #allocation0 [shape = 'u32[]', space=smem, size = 0x4, offset = 0x4, fixed_abs, tag = 'smem constant byte address 0x4 - core index']
  #allocation1 [shape = 'u32[144,128]{1,0:T(1,128)}', space=vmem, size = 0x12000, scoped, tag = 'internal scratch']
  %s0 = inlined_call_operand.vmem [shape: f32[128,4], index: 0, kind: input, shape index: {}]
  %s1 = inlined_call_operand.vmem [shape: f32[4,32], index: 1, kind: input, shape index: {}]
  %s2 = inlined_call_operand.vmem [shape: f32[1,32], index: 2, kind: input, shape index: {}]
  %s3 = inlined_call_operand.vmem [shape: f32[32,128], index: 3, kind: input, shape index: {}]
  %s4 = inlined_call_operand.vmem [shape: f32[1,128], index: 4, kind: input, shape index: {}]
  %s5 = inlined_call_operand.hbm [shape: f32[128,128], index: 5, kind: output, shape index: {}]
  %s6 = sld [smem:[#allocation0]]
  $region30: #{tpu_custom_call.1} parent=0
    _
  %s8 = ssub.s32 1, %s6
  %s9 = scalar_select 0, %s8, %s6
  $region1: #{tpu_custom_call.1} parent=0
    #allocation2 [shape = 'u8[65536]{0}', space=vmem, size = 0x10000, scoped, tag = 'output window, operand 0, single buffered']
    #allocation3 [shape = 's32[1]{0}', space=sflag, size = 0x4, scoped, tag = 'scoped memory for tpu_custom_call.1']
    %10 = vsyncpa [#allocation3], 0
    // Predicated region
    $region2: #{tpu_custom_call.1} parent=1 // pred_check
      _
    $region3: #{tpu_custom_call.1} parent=1 // pred_check_branch
      %12 = sbr.rel (0) target = $region5
    $region4: #{tpu_custom_call.1} parent=1 // pred_region
      _
    $region5: #{tpu_custom_call.1} parent=1 // pred_fallthru
      _
    // Predicated region
    $region6: #{tpu_custom_call.1} parent=1 // pred_check
      _
    $region7: #{tpu_custom_call.1} parent=1 // pred_check_branch
      %14 = sbr.rel (0) target = $region9
    $region8: #{tpu_custom_call.1} parent=1 // pred_region
      _
    $region9: #{tpu_custom_call.1} parent=1 // pred_fallthru
      _
    // Predicated region
    $region10: #{tpu_custom_call.1} parent=1 // pred_check
      _
    $region11: #{tpu_custom_call.1} parent=1 // pred_check_branch
      %16 = sbr.rel (0) target = $region13
    $region12: #{tpu_custom_call.1} parent=1 // pred_region
      _
    $region13: #{tpu_custom_call.1} parent=1 // pred_fallthru
      _
    // Predicated region
    $region14: #{tpu_custom_call.1} parent=1 // pred_check
      _
    $region15: #{tpu_custom_call.1} parent=1 // pred_check_branch
      %18 = sbr.rel (0) target = $region17
    $region16: #{tpu_custom_call.1} parent=1 // pred_region
      _
    $region17: #{tpu_custom_call.1} parent=1 // pred_fallthru
      _
    // Predicated region
    $region18: #{tpu_custom_call.1} parent=1 // pred_check
      _
    $region19: #{tpu_custom_call.1} parent=1 // pred_check_branch
      %20 = sbr.rel (0) target = $region21
    $region20: #{tpu_custom_call.1} parent=1 // pred_region
      _
    $region21: #{tpu_custom_call.1} parent=1 // pred_fallthru
      _
    %v21 = vld [vmem:[%s0] sm:$0xff]
    %v22 = vld [vmem:[%s0 + $0x8] sm:$0xff]
    %v23 = vld [vmem:[%s0 + $0x10] sm:$0xff]
    %v24 = vld [vmem:[%s0 + $0x18] sm:$0xff]
    %v25 = vld [vmem:[%s0 + $0x20] sm:$0xff]
    %v26 = vld [vmem:[%s0 + $0x28] sm:$0xff]
    %v27 = vld [vmem:[%s0 + $0x30] sm:$0xff]
    %v28 = vld [vmem:[%s0 + $0x38] sm:$0xff]
    %v29 = vld [vmem:[%s0 + $0x40] sm:$0xff]
    %v30 = vld [vmem:[%s0 + $0x48] sm:$0xff]
    %v31 = vld [vmem:[%s0 + $0x50] sm:$0xff]
    %v32 = vld [vmem:[%s0 + $0x58] sm:$0xff]
    %v33 = vld [vmem:[%s0 + $0x60] sm:$0xff]
    %v34 = vld [vmem:[%s0 + $0x68] sm:$0xff]
    %v35 = vld [vmem:[%s0 + $0x70] sm:$0xff]
    %v36 = vld [vmem:[%s0 + $0x78] sm:$0xff]
    %v37 = vld [vmem:[%s1] sm:$0xf]
    %v38 = vld [vmem:[%s2] sm:$0x1]
    %v40 = vlaneseq
    %v41 = vshrl.u32 %v40, 7
    %v42 = vsub.s32 0, %v41
    %v43 = vrot.slane %v38, %v42
    %vm45 = vcmask 31744
    %v47 = vsel %vm45, %v21, 0
    %v50 = vsel %vm45, %v22, 0
    %v53 = vsel %vm45, %v23, 0
    %v56 = vsel %vm45, %v24, 0
    %v59 = vsel %vm45, %v25, 0
    %v62 = vsel %vm45, %v26, 0
    %v65 = vsel %vm45, %v27, 0
    %v68 = vsel %vm45, %v28, 0
    %v71 = vsel %vm45, %v29, 0
    %v74 = vsel %vm45, %v30, 0
    %v77 = vsel %vm45, %v31, 0
    %v80 = vsel %vm45, %v32, 0
    %v83 = vsel %vm45, %v33, 0
    %v86 = vsel %vm45, %v34, 0
    %v89 = vsel %vm45, %v35, 0
    %v92 = vsel %vm45, %v36, 0
    %vm94 = vcmask 1043456
    %v96 = vsel %vm94, %v37, 0
    %98 = vmatprep.subr.mxu0 0.0
    %99 = vmatpush1.msra.mxu0 %v96
    %100 = vmatprep.subr.mxu0 0.0
    %101 = vmatpush1.msra.mxu0 0.0
    %102 = vmatprep.subr.mxu0 0.0
    %103 = vmatpush1.msra.mxu0 0.0
    %104 = vmatprep.subr.mxu0 0.0
    %105 = vmatpush1.msra.mxu0 0.0
    %106 = vmatprep.subr.mxu0 0.0
    %107 = vmatpush1.msra.mxu0 0.0
    %108 = vmatprep.subr.mxu0 0.0
    %109 = vmatpush1.msra.mxu0 0.0
    %110 = vmatprep.subr.mxu0 0.0
    %111 = vmatpush1.msra.mxu0 0.0
    %112 = vmatprep.subr.mxu0 0.0
    %113 = vmatpush1.msra.mxu0 0.0
    %114 = vmatprep.subr.mxu0 0.0
    %115 = vmatpush1.msra.mxu0 0.0
    %116 = vmatprep.subr.mxu0 0.0
    %117 = vmatpush1.msra.mxu0 0.0
    %118 = vmatprep.subr.mxu0 0.0
    %119 = vmatpush1.msra.mxu0 0.0
    %120 = vmatprep.subr.mxu0 0.0
    %121 = vmatpush1.msra.mxu0 0.0
    %122 = vmatprep.subr.mxu0 0.0
    %123 = vmatpush1.msra.mxu0 0.0
    %124 = vmatprep.subr.mxu0 0.0
    %125 = vmatpush1.msra.mxu0 0.0
    %126 = vmatprep.subr.mxu0 0.0
    %127 = vmatpush1.msra.mxu0 0.0
    %128 = vmatprep.subr.mxu0 0.0
    %129 = vmatpush1.msra.mxu0 0.0
    %130 = vmatprep.subr.mxu0 0.0
    %131 = vmatpush1.msra.mxu0 0.0
    %132 = vmatprep.subr.mxu0 0.0
    %133 = vmatpush1.msra.mxu0 0.0
    %134 = vmatprep.subr.mxu0 0.0
    %135 = vmatpush1.msra.mxu0 0.0
    %136 = vmatprep.subr.mxu0 0.0
    %137 = vmatpush1.msra.mxu0 0.0
    %138 = vmatprep.subr.mxu0 0.0
    %139 = vmatpush1.msra.mxu0 0.0
    %140 = vmatprep.subr.mxu0 0.0
    %141 = vmatpush1.msra.mxu0 0.0
    %142 = vmatprep.subr.mxu0 0.0
    %143 = vmatpush1.msra.mxu0 0.0
    %144 = vmatprep.subr.mxu0 0.0
    %145 = vmatpush1.msra.mxu0 0.0
    %146 = vmatprep.subr.mxu0 0.0
    %147 = vmatpush1.msra.mxu0 0.0
    %148 = vmatprep.subr.mxu0 0.0
    %149 = vmatpush1.msra.mxu0 0.0
    %150 = vmatprep.subr.mxu0 0.0
    %151 = vmatpush1.msra.mxu0 0.0
    %152 = vmatprep.subr.mxu0 0.0
    %153 = vmatpush1.msra.mxu0 0.0
    %154 = vmatprep.subr.mxu0 0.0
    %155 = vmatpush1.msra.mxu0 0.0
    %156 = vmatprep.subr.mxu0 0.0
    %157 = vmatpush1.msra.mxu0 0.0
    %158 = vmatprep.subr.mxu0 0.0
    %159 = vmatpush1.msra.mxu0 0.0
    %160 = vmatprep.subr.mxu0 0.0
    %161 = vmatpush1.msra.mxu0 0.0
    %162 = vmatprep.mubr.f32.mxu0 0.0
    %163 = vmatmul.mubr.f32.gmra.mrb[0].mxu0 %v47
    %v164 = vpop.f32.mrb[0].mxu0
    %v165 = vadd.f32 %v43, %v164
    %v166 = vpop.f32.mrb[0].mxu0
    %167 = vmatprep.mubr.f32.mxu0 0.0
    %168 = vmatmul.mubr.f32.gmra.mrb[0].mxu0 %v50
    %v169 = vpop.f32.mrb[0].mxu0
    %v170 = vadd.f32 %v43, %v169
    %v171 = vpop.f32.mrb[0].mxu0
    %172 = vmatprep.mubr.f32.mxu0 0.0
    %173 = vmatmul.mubr.f32.gmra.mrb[0].mxu0 %v53
    %v174 = vpop.f32.mrb[0].mxu0
    %v175 = vadd.f32 %v43, %v174
    %v176 = vpop.f32.mrb[0].mxu0
    %177 = vmatprep.mubr.f32.mxu0 0.0
    %178 = vmatmul.mubr.f32.gmra.mrb[0].mxu0 %v56
    %v179 = vpop.f32.mrb[0].mxu0
    %v180 = vadd.f32 %v43, %v179
    %v181 = vpop.f32.mrb[0].mxu0
    %182 = vmatprep.mubr.f32.mxu0 0.0
    %183 = vmatmul.mubr.f32.gmra.mrb[0].mxu0 %v59
    %v184 = vpop.f32.mrb[0].mxu0
    %v185 = vadd.f32 %v43, %v184
    %v186 = vpop.f32.mrb[0].mxu0
    %187 = vmatprep.mubr.f32.mxu0 0.0
    %188 = vmatmul.mubr.f32.gmra.mrb[0].mxu0 %v62
    %v189 = vpop.f32.mrb[0].mxu0
    %v190 = vadd.f32 %v43, %v189
    %v191 = vpop.f32.mrb[0].mxu0
    %192 = vmatprep.mubr.f32.mxu0 0.0
    %193 = vmatmul.mubr.f32.gmra.mrb[0].mxu0 %v65
    %v194 = vpop.f32.mrb[0].mxu0
    %v195 = vadd.f32 %v43, %v194
    %v196 = vpop.f32.mrb[0].mxu0
    %197 = vmatprep.mubr.f32.mxu0 0.0
    %198 = vmatmul.mubr.f32.gmra.mrb[0].mxu0 %v68
    %v199 = vpop.f32.mrb[0].mxu0
    %v200 = vadd.f32 %v43, %v199
    %v201 = vpop.f32.mrb[0].mxu0
    %202 = vmatprep.mubr.f32.mxu0 0.0
    %203 = vmatmul.mubr.f32.gmra.mrb[0].mxu0 %v71
    %v204 = vpop.f32.mrb[0].mxu0
    %v205 = vadd.f32 %v43, %v204
    %v206 = vpop.f32.mrb[0].mxu0
    %207 = vmatprep.mubr.f32.mxu0 0.0
    %208 = vmatmul.mubr.f32.gmra.mrb[0].mxu0 %v74
    %v209 = vpop.f32.mrb[0].mxu0
    %v210 = vadd.f32 %v43, %v209
    %v211 = vpop.f32.mrb[0].mxu0
    %212 = vmatprep.mubr.f32.mxu0 0.0
    %213 = vmatmul.mubr.f32.gmra.mrb[0].mxu0 %v77
    %v214 = vpop.f32.mrb[0].mxu0
    %v215 = vadd.f32 %v43, %v214
    %v216 = vpop.f32.mrb[0].mxu0
    %217 = vmatprep.mubr.f32.mxu0 0.0
    %218 = vmatmul.mubr.f32.gmra.mrb[0].mxu0 %v80
    %v219 = vpop.f32.mrb[0].mxu0
    %v220 = vadd.f32 %v43, %v219
    %v221 = vpop.f32.mrb[0].mxu0
    %222 = vmatprep.mubr.f32.mxu0 0.0
    %223 = vmatmul.mubr.f32.gmra.mrb[0].mxu0 %v83
    %v224 = vpop.f32.mrb[0].mxu0
    %v225 = vadd.f32 %v43, %v224
    %v226 = vpop.f32.mrb[0].mxu0
    %227 = vmatprep.mubr.f32.mxu0 0.0
    %228 = vmatmul.mubr.f32.gmra.mrb[0].mxu0 %v86
    %v229 = vpop.f32.mrb[0].mxu0
    %v230 = vadd.f32 %v43, %v229
    %v231 = vpop.f32.mrb[0].mxu0
    %232 = vmatprep.mubr.f32.mxu0 0.0
    %233 = vmatmul.mubr.f32.gmra.mrb[0].mxu0 %v89
    %v234 = vpop.f32.mrb[0].mxu0
    %v235 = vadd.f32 %v43, %v234
    %v236 = vpop.f32.mrb[0].mxu0
    %237 = vmatprep.mubr.f32.mxu0 0.0
    %238 = vmatmul.mubr.f32.gmra.mrb[0].mxu0 %v92
    %v239 = vpop.f32.mrb[0].mxu0
    %v240 = vadd.f32 %v43, %v239
    %v241 = vpop.f32.mrb[0].mxu0
    %242 = vdwg.mxu0
    %v243 = vand.u32 2147483647, %v165
    %vm244 = vcmp.le.f32.partialorder %v243, 0.7853982
    %vm245 = vcmp.lt.s32.totalorder %v165, 0
    %v246 = vand.u32 %v165, 2139095040
    %v247 = vshrl.u32 %v246, 23
    %v248 = vsub.s32 %v247, 127
    %v249 = vand.u32 2147483647, %v165
    %v250 = vand.u32 %v249, 8388607
    %v251 = vor.u32 %v250, 8388608
    %v252 = vsub.s32 0, %v251
    %v253 = vadd.s32 %v248, 1
    %vm254 = vcmp.gt.s32.totalorder %v253, 0
    %v255 = vsel %vm254, %v253, 0
    %v256 = vshrl.u32 %v255, 5
    %v257 = vand.u32 %v255, 31
    %v258 = vsub.s32 32, %v257
    %v259 = vshrl.u32 683565275, %v258
    %v260 = vshll.u32 683565275, %v257
    %v261 = vshrl.u32 2475754826, %v258
    %v262 = vor.u32 %v260, %v261
    %v263 = vshll.u32 2475754826, %v257
    %v264 = vshrl.u32 2131351028, %v258
    %v265 = vor.u32 %v263, %v264
    %v266 = vshll.u32 2131351028, %v257
    %v267 = vshrl.u32 2102212464, %v258
    %v268 = vor.u32 %v266, %v267
    %v269 = vshll.u32 2102212464, %v257
    %v270 = vshrl.u32 920167782, %v258
    %v271 = vor.u32 %v269, %v270
    %v272 = vshll.u32 920167782, %v257
    %v273 = vshrl.u32 1326507024, %v258
    %v274 = vor.u32 %v272, %v273
    %vm275 = vcmp.lt.s32.totalorder %v256, 1
    %vm276 = vcmp.lt.s32.totalorder %v256, 2
    %vm277 = vcmp.lt.s32.totalorder %v256, 3
    %vm278 = vcmp.lt.s32.totalorder %v256, 4
    %v279 = vsel %vm275, %v259, %v262
    %v280 = vsel %vm278, %v268, 2102212464
    %v281 = vsel %vm277, %v265, %v280
    %v282 = vsel %vm276, %v279, %v281
    %v283 = vsel %vm275, %v262, %v265
    %v284 = vsel %vm278, %v271, 920167782
    %v285 = vsel %vm277, %v268, %v284
    %v286 = vsel %vm276, %v283, %v285
    %v287 = vsel %vm275, %v265, %v268
    %v288 = vsel %vm278, %v274, 1326507024
    %v289 = vsel %vm277, %v271, %v288
    %v290 = vsel %vm276, %v287, %v289
    %v291 = vshll.u32 %v251, 8
    %v292 = vmul.u32.u64.compose %v291, %v290
    %v293 = vextract.low.u32 %v292
    %v294 = vextract.high.u32 %v292
    %v295 = vmul.u32.u64.compose %v291, %v286
    %v296 = vextract.low.u32 %v295
    %v297 = vextract.high.u32 %v295
    %v298 = vmul.u32 %v291, %v282
    %v299 = vadd.s32 %v294, %v296
    %vm300 = vc.u32 %v294, %v296
    %v301 = vadd.s32 %v297, 1
    %v302 = vsel %vm300, %v301, %v297
    %v303 = vadd.s32 %v298, %v302
    %v304 = vadd.s32 %v303, 536870912
    %v305 = vshrl.u32 %v304, 30
    %v306 = vshll.u32 %v305, 30
    %v307 = vsub.s32 %v303, %v306
    %vm308 = vcmp.lt.s32.totalorder %v307, 0
    %v309 = vsub.s32 0, %v307
    %v310 = vsel %vm308, %v309, %v307
    %v311 = vclz %v310
    %v312 = vsub.s32 %v311, 2
    %vm313 = vcmp.gt.s32.totalorder 0, %v312
    %v314 = vsel %vm313, 0, %v312
    %v315 = vsub.s32 32, %v314
    %v316 = vshll.u32 %v307, %v314
    %v317 = vshrl.u32 %v299, %v315
    %v318 = vor.u32 %v316, %v317
    %v319 = vsub.s32 4294967266, %v314
    %v320 = vadd.s32 %v319, 127
    %v321 = vshll.u32 %v320, 23
    %v322 = vor.u32 4788187, %v321
    %v323 = vand.u32 2147483647, %v322
    %v325 = vcvt.s32.f32 %v318
    %v326 = vmul.f32 %v325, %v323
    %v327 = vxor.u32 %v326, 2147483648
    %v328 = vsel %vm245, %v327, %v326
    %v329 = vsub.s32 4, %v305
    %v330 = vsel %vm245, %v329, %v305
    %v331 = vsel %vm244, %v165, %v328
    %v332 = vsel %vm244, 0, %v330
    %v333 = vcosq.f32.pop %v331
    %v334 = vsinq.f32.pop %v331
    %vm335 = vweird.f32 %v165
    %v336 = vand.u32 %v332, 3
    %vm337 = vcmp.lt.s32.totalorder %v336, 2
    %vm338 = vcmp.eq.s32.totalorder %v336, 0
    %v339 = vxor.u32 %v334, 2147483648
    %v340 = vsel %vm338, %v333, %v339
    %vm341 = vcmp.eq.s32.totalorder %v336, 2
    %v342 = vxor.u32 %v333, 2147483648
    %v343 = vsel %vm341, %v342, %v334
    %v344 = vsel %vm337, %v340, %v343
    %v345 = vsel %vm335, nan, %v344
    %v346 = vand.u32 2147483647, %v170
    %vm347 = vcmp.le.f32.partialorder %v346, 0.7853982
    %vm348 = vcmp.lt.s32.totalorder %v170, 0
    %v349 = vand.u32 %v170, 2139095040
    %v350 = vshrl.u32 %v349, 23
    %v351 = vsub.s32 %v350, 127
    %v352 = vand.u32 2147483647, %v170
    %v353 = vand.u32 %v352, 8388607
    %v354 = vor.u32 %v353, 8388608
    %v355 = vsub.s32 0, %v354
    %v356 = vadd.s32 %v351, 1
    %vm357 = vcmp.gt.s32.totalorder %v356, 0
    %v358 = vsel %vm357, %v356, 0
    %v359 = vshrl.u32 %v358, 5
    %v360 = vand.u32 %v358, 31
    %v361 = vsub.s32 32, %v360
    %v362 = vshrl.u32 683565275, %v361
    %v363 = vshll.u32 683565275, %v360
    %v364 = vshrl.u32 2475754826, %v361
    %v365 = vor.u32 %v363, %v364
    %v366 = vshll.u32 2475754826, %v360
    %v367 = vshrl.u32 2131351028, %v361
    %v368 = vor.u32 %v366, %v367
    %v369 = vshll.u32 2131351028, %v360
    %v370 = vshrl.u32 2102212464, %v361
    %v371 = vor.u32 %v369, %v370
    %v372 = vshll.u32 2102212464, %v360
    %v373 = vshrl.u32 920167782, %v361
    %v374 = vor.u32 %v372, %v373
    %v375 = vshll.u32 920167782, %v360
    %v376 = vshrl.u32 1326507024, %v361
    %v377 = vor.u32 %v375, %v376
    %vm378 = vcmp.lt.s32.totalorder %v359, 1
    %vm379 = vcmp.lt.s32.totalorder %v359, 2
    %vm380 = vcmp.lt.s32.totalorder %v359, 3
    %vm381 = vcmp.lt.s32.totalorder %v359, 4
    %v382 = vsel %vm378, %v362, %v365
    %v383 = vsel %vm381, %v371, 2102212464
    %v384 = vsel %vm380, %v368, %v383
    %v385 = vsel %vm379, %v382, %v384
    %v386 = vsel %vm378, %v365, %v368
    %v387 = vsel %vm381, %v374, 920167782
    %v388 = vsel %vm380, %v371, %v387
    %v389 = vsel %vm379, %v386, %v388
    %v390 = vsel %vm378, %v368, %v371
    %v391 = vsel %vm381, %v377, 1326507024
    %v392 = vsel %vm380, %v374, %v391
    %v393 = vsel %vm379, %v390, %v392
    %v394 = vshll.u32 %v354, 8
    %v395 = vmul.u32.u64.compose %v394, %v393
    %v396 = vextract.low.u32 %v395
    %v397 = vextract.high.u32 %v395
    %v398 = vmul.u32.u64.compose %v394, %v389
    %v399 = vextract.low.u32 %v398
    %v400 = vextract.high.u32 %v398
    %v401 = vmul.u32 %v394, %v385
    %v402 = vadd.s32 %v397, %v399
    %vm403 = vc.u32 %v397, %v399
    %v404 = vadd.s32 %v400, 1
    %v405 = vsel %vm403, %v404, %v400
    %v406 = vadd.s32 %v401, %v405
    %v407 = vadd.s32 %v406, 536870912
    %v408 = vshrl.u32 %v407, 30
    %v409 = vshll.u32 %v408, 30
    %v410 = vsub.s32 %v406, %v409
    %vm411 = vcmp.lt.s32.totalorder %v410, 0
    %v412 = vsub.s32 0, %v410
    %v413 = vsel %vm411, %v412, %v410
    %v414 = vclz %v413
    %v415 = vsub.s32 %v414, 2
    %vm416 = vcmp.gt.s32.totalorder 0, %v415
    %v417 = vsel %vm416, 0, %v415
    %v418 = vsub.s32 32, %v417
    %v419 = vshll.u32 %v410, %v417
    %v420 = vshrl.u32 %v402, %v418
    %v421 = vor.u32 %v419, %v420
    %v422 = vsub.s32 4294967266, %v417
    %v423 = vadd.s32 %v422, 127
    %v424 = vshll.u32 %v423, 23
    %v425 = vor.u32 4788187, %v424
    %v426 = vand.u32 2147483647, %v425
    %v428 = vcvt.s32.f32 %v421
    %v429 = vmul.f32 %v428, %v426
    %v430 = vxor.u32 %v429, 2147483648
    %v431 = vsel %vm348, %v430, %v429
    %v432 = vsub.s32 4, %v408
    %v433 = vsel %vm348, %v432, %v408
    %v434 = vsel %vm347, %v170, %v431
    %v435 = vsel %vm347, 0, %v433
    %v436 = vcosq.f32.pop %v434
    %v437 = vsinq.f32.pop %v434
    %vm438 = vweird.f32 %v170
    %v439 = vand.u32 %v435, 3
    %vm440 = vcmp.lt.s32.totalorder %v439, 2
    %vm441 = vcmp.eq.s32.totalorder %v439, 0
    %v442 = vxor.u32 %v437, 2147483648
    %v443 = vsel %vm441, %v436, %v442
    %vm444 = vcmp.eq.s32.totalorder %v439, 2
    %v445 = vxor.u32 %v436, 2147483648
    %v446 = vsel %vm444, %v445, %v437
    %v447 = vsel %vm440, %v443, %v446
    %v448 = vsel %vm438, nan, %v447
    %v449 = vand.u32 2147483647, %v175
    %vm450 = vcmp.le.f32.partialorder %v449, 0.7853982
    %vm451 = vcmp.lt.s32.totalorder %v175, 0
    %v452 = vand.u32 %v175, 2139095040
    %v453 = vshrl.u32 %v452, 23
    %v454 = vsub.s32 %v453, 127
    %v455 = vand.u32 2147483647, %v175
    %v456 = vand.u32 %v455, 8388607
    %v457 = vor.u32 %v456, 8388608
    %v458 = vsub.s32 0, %v457
    %v459 = vadd.s32 %v454, 1
    %vm460 = vcmp.gt.s32.totalorder %v459, 0
    %v461 = vsel %vm460, %v459, 0
    %v462 = vshrl.u32 %v461, 5
    %v463 = vand.u32 %v461, 31
    %v464 = vsub.s32 32, %v463
    %v465 = vshrl.u32 683565275, %v464
    %v466 = vshll.u32 683565275, %v463
    %v467 = vshrl.u32 2475754826, %v464
    %v468 = vor.u32 %v466, %v467
    %v469 = vshll.u32 2475754826, %v463
    %v470 = vshrl.u32 2131351028, %v464
    %v471 = vor.u32 %v469, %v470
    %v472 = vshll.u32 2131351028, %v463
    %v473 = vshrl.u32 2102212464, %v464
    %v474 = vor.u32 %v472, %v473
    %v475 = vshll.u32 2102212464, %v463
    %v476 = vshrl.u32 920167782, %v464
    %v477 = vor.u32 %v475, %v476
    %v478 = vshll.u32 920167782, %v463
    %v479 = vshrl.u32 1326507024, %v464
    %v480 = vor.u32 %v478, %v479
    %vm481 = vcmp.lt.s32.totalorder %v462, 1
    %vm482 = vcmp.lt.s32.totalorder %v462, 2
    %vm483 = vcmp.lt.s32.totalorder %v462, 3
    %vm484 = vcmp.lt.s32.totalorder %v462, 4
    %v485 = vsel %vm481, %v465, %v468
    %v486 = vsel %vm484, %v474, 2102212464
    %v487 = vsel %vm483, %v471, %v486
    %v488 = vsel %vm482, %v485, %v487
    %v489 = vsel %vm481, %v468, %v471
    %v490 = vsel %vm484, %v477, 920167782
    %v491 = vsel %vm483, %v474, %v490
    %v492 = vsel %vm482, %v489, %v491
    %v493 = vsel %vm481, %v471, %v474
    %v494 = vsel %vm484, %v480, 1326507024
    %v495 = vsel %vm483, %v477, %v494
    %v496 = vsel %vm482, %v493, %v495
    %v497 = vshll.u32 %v457, 8
    %v498 = vmul.u32.u64.compose %v497, %v496
    %v499 = vextract.low.u32 %v498
    %v500 = vextract.high.u32 %v498
    %v501 = vmul.u32.u64.compose %v497, %v492
    %v502 = vextract.low.u32 %v501
    %v503 = vextract.high.u32 %v501
    %v504 = vmul.u32 %v497, %v488
    %v505 = vadd.s32 %v500, %v502
    %vm506 = vc.u32 %v500, %v502
    %v507 = vadd.s32 %v503, 1
    %v508 = vsel %vm506, %v507, %v503
    %v509 = vadd.s32 %v504, %v508
    %v510 = vadd.s32 %v509, 536870912
    %v511 = vshrl.u32 %v510, 30
    %v512 = vshll.u32 %v511, 30
    %v513 = vsub.s32 %v509, %v512
    %vm514 = vcmp.lt.s32.totalorder %v513, 0
    %v515 = vsub.s32 0, %v513
    %v516 = vsel %vm514, %v515, %v513
    %v517 = vclz %v516
    %v518 = vsub.s32 %v517, 2
    %vm519 = vcmp.gt.s32.totalorder 0, %v518
    %v520 = vsel %vm519, 0, %v518
    %v521 = vsub.s32 32, %v520
    %v522 = vshll.u32 %v513, %v520
    %v523 = vshrl.u32 %v505, %v521
    %v524 = vor.u32 %v522, %v523
    %v525 = vsub.s32 4294967266, %v520
    %v526 = vadd.s32 %v525, 127
    %v527 = vshll.u32 %v526, 23
    %v528 = vor.u32 4788187, %v527
    %v529 = vand.u32 2147483647, %v528
    %v531 = vcvt.s32.f32 %v524
    %v532 = vmul.f32 %v531, %v529
    %v533 = vxor.u32 %v532, 2147483648
    %v534 = vsel %vm451, %v533, %v532
    %v535 = vsub.s32 4, %v511
    %v536 = vsel %vm451, %v535, %v511
    %v537 = vsel %vm450, %v175, %v534
    %v538 = vsel %vm450, 0, %v536
    %v539 = vcosq.f32.pop %v537
    %v540 = vsinq.f32.pop %v537
    %vm541 = vweird.f32 %v175
    %v542 = vand.u32 %v538, 3
    %vm543 = vcmp.lt.s32.totalorder %v542, 2
    %vm544 = vcmp.eq.s32.totalorder %v542, 0
    %v545 = vxor.u32 %v540, 2147483648
    %v546 = vsel %vm544, %v539, %v545
    %vm547 = vcmp.eq.s32.totalorder %v542, 2
    %v548 = vxor.u32 %v539, 2147483648
    %v549 = vsel %vm547, %v548, %v540
    %v550 = vsel %vm543, %v546, %v549
    %v551 = vsel %vm541, nan, %v550
    %v552 = vand.u32 2147483647, %v180
    %vm553 = vcmp.le.f32.partialorder %v552, 0.7853982
    %vm554 = vcmp.lt.s32.totalorder %v180, 0
    %v555 = vand.u32 %v180, 2139095040
    %v556 = vshrl.u32 %v555, 23
    %v557 = vsub.s32 %v556, 127
    %v558 = vand.u32 2147483647, %v180
    %v559 = vand.u32 %v558, 8388607
    %v560 = vor.u32 %v559, 8388608
    %v561 = vsub.s32 0, %v560
    %v562 = vadd.s32 %v557, 1
    %vm563 = vcmp.gt.s32.totalorder %v562, 0
    %v564 = vsel %vm563, %v562, 0
    %v565 = vshrl.u32 %v564, 5
    %v566 = vand.u32 %v564, 31
    %v567 = vsub.s32 32, %v566
    %v568 = vshrl.u32 683565275, %v567
    %v569 = vshll.u32 683565275, %v566
    %v570 = vshrl.u32 2475754826, %v567
    %v571 = vor.u32 %v569, %v570
    %v572 = vshll.u32 2475754826, %v566
    %v573 = vshrl.u32 2131351028, %v567
    %v574 = vor.u32 %v572, %v573
    %v575 = vshll.u32 2131351028, %v566
    %v576 = vshrl.u32 2102212464, %v567
    %v577 = vor.u32 %v575, %v576
    %v578 = vshll.u32 2102212464, %v566
    %v579 = vshrl.u32 920167782, %v567
    %v580 = vor.u32 %v578, %v579
    %v581 = vshll.u32 920167782, %v566
    %v582 = vshrl.u32 1326507024, %v567
    %v583 = vor.u32 %v581, %v582
    %vm584 = vcmp.lt.s32.totalorder %v565, 1
    %vm585 = vcmp.lt.s32.totalorder %v565, 2
    %vm586 = vcmp.lt.s32.totalorder %v565, 3
    %vm587 = vcmp.lt.s32.totalorder %v565, 4
    %v588 = vsel %vm584, %v568, %v571
    %v589 = vsel %vm587, %v577, 2102212464
    %v590 = vsel %vm586, %v574, %v589
    %v591 = vsel %vm585, %v588, %v590
    %v592 = vsel %vm584, %v571, %v574
    %v593 = vsel %vm587, %v580, 920167782
    %v594 = vsel %vm586, %v577, %v593
    %v595 = vsel %vm585, %v592, %v594
    %v596 = vsel %vm584, %v574, %v577
    %v597 = vsel %vm587, %v583, 1326507024
    %v598 = vsel %vm586, %v580, %v597
    %v599 = vsel %vm585, %v596, %v598
    %v600 = vshll.u32 %v560, 8
    %v601 = vmul.u32.u64.compose %v600, %v599
    %v602 = vextract.low.u32 %v601
    %v603 = vextract.high.u32 %v601
    %v604 = vmul.u32.u64.compose %v600, %v595
    %v605 = vextract.low.u32 %v604
    %v606 = vextract.high.u32 %v604
    %v607 = vmul.u32 %v600, %v591
    %v608 = vadd.s32 %v603, %v605
    %vm609 = vc.u32 %v603, %v605
    %v610 = vadd.s32 %v606, 1
    %v611 = vsel %vm609, %v610, %v606
    %v612 = vadd.s32 %v607, %v611
    %v613 = vadd.s32 %v612, 536870912
    %v614 = vshrl.u32 %v613, 30
    %v615 = vshll.u32 %v614, 30
    %v616 = vsub.s32 %v612, %v615
    %vm617 = vcmp.lt.s32.totalorder %v616, 0
    %v618 = vsub.s32 0, %v616
    %v619 = vsel %vm617, %v618, %v616
    %v620 = vclz %v619
    %v621 = vsub.s32 %v620, 2
    %vm622 = vcmp.gt.s32.totalorder 0, %v621
    %v623 = vsel %vm622, 0, %v621
    %v624 = vsub.s32 32, %v623
    %v625 = vshll.u32 %v616, %v623
    %v626 = vshrl.u32 %v608, %v624
    %v627 = vor.u32 %v625, %v626
    %v628 = vsub.s32 4294967266, %v623
    %v629 = vadd.s32 %v628, 127
    %v630 = vshll.u32 %v629, 23
    %v631 = vor.u32 4788187, %v630
    %v632 = vand.u32 2147483647, %v631
    %v634 = vcvt.s32.f32 %v627
    %v635 = vmul.f32 %v634, %v632
    %v636 = vxor.u32 %v635, 2147483648
    %v637 = vsel %vm554, %v636, %v635
    %v638 = vsub.s32 4, %v614
    %v639 = vsel %vm554, %v638, %v614
    %v640 = vsel %vm553, %v180, %v637
    %v641 = vsel %vm553, 0, %v639
    %v642 = vcosq.f32.pop %v640
    %v643 = vsinq.f32.pop %v640
    %vm644 = vweird.f32 %v180
    %v645 = vand.u32 %v641, 3
    %vm646 = vcmp.lt.s32.totalorder %v645, 2
    %vm647 = vcmp.eq.s32.totalorder %v645, 0
    %v648 = vxor.u32 %v643, 2147483648
    %v649 = vsel %vm647, %v642, %v648
    %vm650 = vcmp.eq.s32.totalorder %v645, 2
    %v651 = vxor.u32 %v642, 2147483648
    %v652 = vsel %vm650, %v651, %v643
    %v653 = vsel %vm646, %v649, %v652
    %v654 = vsel %vm644, nan, %v653
    %v655 = vand.u32 2147483647, %v185
    %vm656 = vcmp.le.f32.partialorder %v655, 0.7853982
    %vm657 = vcmp.lt.s32.totalorder %v185, 0
    %v658 = vand.u32 %v185, 2139095040
    %v659 = vshrl.u32 %v658, 23
    %v660 = vsub.s32 %v659, 127
    %v661 = vand.u32 2147483647, %v185
    %v662 = vand.u32 %v661, 8388607
    %v663 = vor.u32 %v662, 8388608
    %v664 = vsub.s32 0, %v663
    %v665 = vadd.s32 %v660, 1
    %vm666 = vcmp.gt.s32.totalorder %v665, 0
    %v667 = vsel %vm666, %v665, 0
    %v668 = vshrl.u32 %v667, 5
    %v669 = vand.u32 %v667, 31
    %v670 = vsub.s32 32, %v669
    %v671 = vshrl.u32 683565275, %v670
    %v672 = vshll.u32 683565275, %v669
    %v673 = vshrl.u32 2475754826, %v670
    %v674 = vor.u32 %v672, %v673
    %v675 = vshll.u32 2475754826, %v669
    %v676 = vshrl.u32 2131351028, %v670
    %v677 = vor.u32 %v675, %v676
    %v678 = vshll.u32 2131351028, %v669
    %v679 = vshrl.u32 2102212464, %v670
    %v680 = vor.u32 %v678, %v679
    %v681 = vshll.u32 2102212464, %v669
    %v682 = vshrl.u32 920167782, %v670
    %v683 = vor.u32 %v681, %v682
    %v684 = vshll.u32 920167782, %v669
    %v685 = vshrl.u32 1326507024, %v670
    %v686 = vor.u32 %v684, %v685
    %vm687 = vcmp.lt.s32.totalorder %v668, 1
    %vm688 = vcmp.lt.s32.totalorder %v668, 2
    %vm689 = vcmp.lt.s32.totalorder %v668, 3
    %vm690 = vcmp.lt.s32.totalorder %v668, 4
    %v691 = vsel %vm687, %v671, %v674
    %v692 = vsel %vm690, %v680, 2102212464
    %v693 = vsel %vm689, %v677, %v692
    %v694 = vsel %vm688, %v691, %v693
    %v695 = vsel %vm687, %v674, %v677
    %v696 = vsel %vm690, %v683, 920167782
    %v697 = vsel %vm689, %v680, %v696
    %v698 = vsel %vm688, %v695, %v697
    %v699 = vsel %vm687, %v677, %v680
    %v700 = vsel %vm690, %v686, 1326507024
    %v701 = vsel %vm689, %v683, %v700
    %v702 = vsel %vm688, %v699, %v701
    %v703 = vshll.u32 %v663, 8
    %v704 = vmul.u32.u64.compose %v703, %v702
    %v705 = vextract.low.u32 %v704
    %v706 = vextract.high.u32 %v704
    %v707 = vmul.u32.u64.compose %v703, %v698
    %v708 = vextract.low.u32 %v707
    %v709 = vextract.high.u32 %v707
    %v710 = vmul.u32 %v703, %v694
    %v711 = vadd.s32 %v706, %v708
    %vm712 = vc.u32 %v706, %v708
    %v713 = vadd.s32 %v709, 1
    %v714 = vsel %vm712, %v713, %v709
    %v715 = vadd.s32 %v710, %v714
    %v716 = vadd.s32 %v715, 536870912
    %v717 = vshrl.u32 %v716, 30
    %v718 = vshll.u32 %v717, 30
    %v719 = vsub.s32 %v715, %v718
    %vm720 = vcmp.lt.s32.totalorder %v719, 0
    %v721 = vsub.s32 0, %v719
    %v722 = vsel %vm720, %v721, %v719
    %v723 = vclz %v722
    %v724 = vsub.s32 %v723, 2
    %vm725 = vcmp.gt.s32.totalorder 0, %v724
    %v726 = vsel %vm725, 0, %v724
    %v727 = vsub.s32 32, %v726
    %v728 = vshll.u32 %v719, %v726
    %v729 = vshrl.u32 %v711, %v727
    %v730 = vor.u32 %v728, %v729
    %v731 = vsub.s32 4294967266, %v726
    %v732 = vadd.s32 %v731, 127
    %v733 = vshll.u32 %v732, 23
    %v734 = vor.u32 4788187, %v733
    %v735 = vand.u32 2147483647, %v734
    %v737 = vcvt.s32.f32 %v730
    %v738 = vmul.f32 %v737, %v735
    %v739 = vxor.u32 %v738, 2147483648
    %v740 = vsel %vm657, %v739, %v738
    %v741 = vsub.s32 4, %v717
    %v742 = vsel %vm657, %v741, %v717
    %v743 = vsel %vm656, %v185, %v740
    %v744 = vsel %vm656, 0, %v742
    %v745 = vcosq.f32.pop %v743
    %v746 = vsinq.f32.pop %v743
    %vm747 = vweird.f32 %v185
    %v748 = vand.u32 %v744, 3
    %vm749 = vcmp.lt.s32.totalorder %v748, 2
    %vm750 = vcmp.eq.s32.totalorder %v748, 0
    %v751 = vxor.u32 %v746, 2147483648
    %v752 = vsel %vm750, %v745, %v751
    %vm753 = vcmp.eq.s32.totalorder %v748, 2
    %v754 = vxor.u32 %v745, 2147483648
    %v755 = vsel %vm753, %v754, %v746
    %v756 = vsel %vm749, %v752, %v755
    %v757 = vsel %vm747, nan, %v756
    %v758 = vand.u32 2147483647, %v190
    %vm759 = vcmp.le.f32.partialorder %v758, 0.7853982
    %vm760 = vcmp.lt.s32.totalorder %v190, 0
    %v761 = vand.u32 %v190, 2139095040
    %v762 = vshrl.u32 %v761, 23
    %v763 = vsub.s32 %v762, 127
    %v764 = vand.u32 2147483647, %v190
    %v765 = vand.u32 %v764, 8388607
    %v766 = vor.u32 %v765, 8388608
    %v767 = vsub.s32 0, %v766
    %v768 = vadd.s32 %v763, 1
    %vm769 = vcmp.gt.s32.totalorder %v768, 0
    %v770 = vsel %vm769, %v768, 0
    %v771 = vshrl.u32 %v770, 5
    %v772 = vand.u32 %v770, 31
    %v773 = vsub.s32 32, %v772
    %v774 = vshrl.u32 683565275, %v773
    %v775 = vshll.u32 683565275, %v772
    %v776 = vshrl.u32 2475754826, %v773
    %v777 = vor.u32 %v775, %v776
    %v778 = vshll.u32 2475754826, %v772
    %v779 = vshrl.u32 2131351028, %v773
    %v780 = vor.u32 %v778, %v779
    %v781 = vshll.u32 2131351028, %v772
    %v782 = vshrl.u32 2102212464, %v773
    %v783 = vor.u32 %v781, %v782
    %v784 = vshll.u32 2102212464, %v772
    %v785 = vshrl.u32 920167782, %v773
    %v786 = vor.u32 %v784, %v785
    %v787 = vshll.u32 920167782, %v772
    %v788 = vshrl.u32 1326507024, %v773
    %v789 = vor.u32 %v787, %v788
    %vm790 = vcmp.lt.s32.totalorder %v771, 1
    %vm791 = vcmp.lt.s32.totalorder %v771, 2
    %vm792 = vcmp.lt.s32.totalorder %v771, 3
    %vm793 = vcmp.lt.s32.totalorder %v771, 4
    %v794 = vsel %vm790, %v774, %v777
    %v795 = vsel %vm793, %v783, 2102212464
    %v796 = vsel %vm792, %v780, %v795
    %v797 = vsel %vm791, %v794, %v796
    %v798 = vsel %vm790, %v777, %v780
    %v799 = vsel %vm793, %v786, 920167782
    %v800 = vsel %vm792, %v783, %v799
    %v801 = vsel %vm791, %v798, %v800
    %v802 = vsel %vm790, %v780, %v783
    %v803 = vsel %vm793, %v789, 1326507024
    %v804 = vsel %vm792, %v786, %v803
    %v805 = vsel %vm791, %v802, %v804
    %v806 = vshll.u32 %v766, 8
    %v807 = vmul.u32.u64.compose %v806, %v805
    %v808 = vextract.low.u32 %v807
    %v809 = vextract.high.u32 %v807
    %v810 = vmul.u32.u64.compose %v806, %v801
    %v811 = vextract.low.u32 %v810
    %v812 = vextract.high.u32 %v810
    %v813 = vmul.u32 %v806, %v797
    %v814 = vadd.s32 %v809, %v811
    %vm815 = vc.u32 %v809, %v811
    %v816 = vadd.s32 %v812, 1
    %v817 = vsel %vm815, %v816, %v812
    %v818 = vadd.s32 %v813, %v817
    %v819 = vadd.s32 %v818, 536870912
    %v820 = vshrl.u32 %v819, 30
    %v821 = vshll.u32 %v820, 30
    %v822 = vsub.s32 %v818, %v821
    %vm823 = vcmp.lt.s32.totalorder %v822, 0
    %v824 = vsub.s32 0, %v822
    %v825 = vsel %vm823, %v824, %v822
    %v826 = vclz %v825
    %v827 = vsub.s32 %v826, 2
    %vm828 = vcmp.gt.s32.totalorder 0, %v827
    %v829 = vsel %vm828, 0, %v827
    %v830 = vsub.s32 32, %v829
    %v831 = vshll.u32 %v822, %v829
    %v832 = vshrl.u32 %v814, %v830
    %v833 = vor.u32 %v831, %v832
    %v834 = vsub.s32 4294967266, %v829
    %v835 = vadd.s32 %v834, 127
    %v836 = vshll.u32 %v835, 23
    %v837 = vor.u32 4788187, %v836
    %v838 = vand.u32 2147483647, %v837
    %v840 = vcvt.s32.f32 %v833
    %v841 = vmul.f32 %v840, %v838
    %v842 = vxor.u32 %v841, 2147483648
    %v843 = vsel %vm760, %v842, %v841
    %v844 = vsub.s32 4, %v820
    %v845 = vsel %vm760, %v844, %v820
    %v846 = vsel %vm759, %v190, %v843
    %v847 = vsel %vm759, 0, %v845
    %v848 = vcosq.f32.pop %v846
    %v849 = vsinq.f32.pop %v846
    %vm850 = vweird.f32 %v190
    %v851 = vand.u32 %v847, 3
    %vm852 = vcmp.lt.s32.totalorder %v851, 2
    %vm853 = vcmp.eq.s32.totalorder %v851, 0
    %v854 = vxor.u32 %v849, 2147483648
    %v855 = vsel %vm853, %v848, %v854
    %vm856 = vcmp.eq.s32.totalorder %v851, 2
    %v857 = vxor.u32 %v848, 2147483648
    %v858 = vsel %vm856, %v857, %v849
    %v859 = vsel %vm852, %v855, %v858
    %v860 = vsel %vm850, nan, %v859
    %v861 = vand.u32 2147483647, %v195
    %vm862 = vcmp.le.f32.partialorder %v861, 0.7853982
    %vm863 = vcmp.lt.s32.totalorder %v195, 0
    %v864 = vand.u32 %v195, 2139095040
    %v865 = vshrl.u32 %v864, 23
    %v866 = vsub.s32 %v865, 127
    %v867 = vand.u32 2147483647, %v195
    %v868 = vand.u32 %v867, 8388607
    %v869 = vor.u32 %v868, 8388608
    %v870 = vsub.s32 0, %v869
    %v871 = vadd.s32 %v866, 1
    %vm872 = vcmp.gt.s32.totalorder %v871, 0
    %v873 = vsel %vm872, %v871, 0
    %v874 = vshrl.u32 %v873, 5
    %v875 = vand.u32 %v873, 31
    %v876 = vsub.s32 32, %v875
    %v877 = vshrl.u32 683565275, %v876
    %v878 = vshll.u32 683565275, %v875
    %v879 = vshrl.u32 2475754826, %v876
    %v880 = vor.u32 %v878, %v879
    %v881 = vshll.u32 2475754826, %v875
    %v882 = vshrl.u32 2131351028, %v876
    %v883 = vor.u32 %v881, %v882
    %v884 = vshll.u32 2131351028, %v875
    %v885 = vshrl.u32 2102212464, %v876
    %v886 = vor.u32 %v884, %v885
    %v887 = vshll.u32 2102212464, %v875
    %v888 = vshrl.u32 920167782, %v876
    %v889 = vor.u32 %v887, %v888
    %v890 = vshll.u32 920167782, %v875
    %v891 = vshrl.u32 1326507024, %v876
    %v892 = vor.u32 %v890, %v891
    %vm893 = vcmp.lt.s32.totalorder %v874, 1
    %vm894 = vcmp.lt.s32.totalorder %v874, 2
    %vm895 = vcmp.lt.s32.totalorder %v874, 3
    %vm896 = vcmp.lt.s32.totalorder %v874, 4
    %v897 = vsel %vm893, %v877, %v880
    %v898 = vsel %vm896, %v886, 2102212464
    %v899 = vsel %vm895, %v883, %v898
    %v900 = vsel %vm894, %v897, %v899
    %v901 = vsel %vm893, %v880, %v883
    %v902 = vsel %vm896, %v889, 920167782
    %v903 = vsel %vm895, %v886, %v902
    %v904 = vsel %vm894, %v901, %v903
    %v905 = vsel %vm893, %v883, %v886
    %v906 = vsel %vm896, %v892, 1326507024
    %v907 = vsel %vm895, %v889, %v906
    %v908 = vsel %vm894, %v905, %v907
    %v909 = vshll.u32 %v869, 8
    %v910 = vmul.u32.u64.compose %v909, %v908
    %v911 = vextract.low.u32 %v910
    %v912 = vextract.high.u32 %v910
    %v913 = vmul.u32.u64.compose %v909, %v904
    %v914 = vextract.low.u32 %v913
    %v915 = vextract.high.u32 %v913
    %v916 = vmul.u32 %v909, %v900
    %v917 = vadd.s32 %v912, %v914
    %vm918 = vc.u32 %v912, %v914
    %v919 = vadd.s32 %v915, 1
    %v920 = vsel %vm918, %v919, %v915
    %v921 = vadd.s32 %v916, %v920
    %v922 = vadd.s32 %v921, 536870912
    %v923 = vshrl.u32 %v922, 30
    %v924 = vshll.u32 %v923, 30
    %v925 = vsub.s32 %v921, %v924
    %vm926 = vcmp.lt.s32.totalorder %v925, 0
    %v927 = vsub.s32 0, %v925
    %v928 = vsel %vm926, %v927, %v925
    %v929 = vclz %v928
    %v930 = vsub.s32 %v929, 2
    %vm931 = vcmp.gt.s32.totalorder 0, %v930
    %v932 = vsel %vm931, 0, %v930
    %v933 = vsub.s32 32, %v932
    %v934 = vshll.u32 %v925, %v932
    %v935 = vshrl.u32 %v917, %v933
    %v936 = vor.u32 %v934, %v935
    %v937 = vsub.s32 4294967266, %v932
    %v938 = vadd.s32 %v937, 127
    %v939 = vshll.u32 %v938, 23
    %v940 = vor.u32 4788187, %v939
    %v941 = vand.u32 2147483647, %v940
    %v943 = vcvt.s32.f32 %v936
    %v944 = vmul.f32 %v943, %v941
    %v945 = vxor.u32 %v944, 2147483648
    %v946 = vsel %vm863, %v945, %v944
    %v947 = vsub.s32 4, %v923
    %v948 = vsel %vm863, %v947, %v923
    %v949 = vsel %vm862, %v195, %v946
    %v950 = vsel %vm862, 0, %v948
    %v951 = vcosq.f32.pop %v949
    %v952 = vsinq.f32.pop %v949
    %vm953 = vweird.f32 %v195
    %v954 = vand.u32 %v950, 3
    %vm955 = vcmp.lt.s32.totalorder %v954, 2
    %vm956 = vcmp.eq.s32.totalorder %v954, 0
    %v957 = vxor.u32 %v952, 2147483648
    %v958 = vsel %vm956, %v951, %v957
    %vm959 = vcmp.eq.s32.totalorder %v954, 2
    %v960 = vxor.u32 %v951, 2147483648
    %v961 = vsel %vm959, %v960, %v952
    %v962 = vsel %vm955, %v958, %v961
    %v963 = vsel %vm953, nan, %v962
    %v964 = vand.u32 2147483647, %v200
    %vm965 = vcmp.le.f32.partialorder %v964, 0.7853982
    %vm966 = vcmp.lt.s32.totalorder %v200, 0
    %v967 = vand.u32 %v200, 2139095040
    %v968 = vshrl.u32 %v967, 23
    %v969 = vsub.s32 %v968, 127
    %v970 = vand.u32 2147483647, %v200
    %v971 = vand.u32 %v970, 8388607
    %v972 = vor.u32 %v971, 8388608
    %v973 = vsub.s32 0, %v972
    %v974 = vadd.s32 %v969, 1
    %vm975 = vcmp.gt.s32.totalorder %v974, 0
    %v976 = vsel %vm975, %v974, 0
    %v977 = vshrl.u32 %v976, 5
    %v978 = vand.u32 %v976, 31
    %v979 = vsub.s32 32, %v978
    %v980 = vshrl.u32 683565275, %v979
    %v981 = vshll.u32 683565275, %v978
    %v982 = vshrl.u32 2475754826, %v979
    %v983 = vor.u32 %v981, %v982
    %v984 = vshll.u32 2475754826, %v978
    %v985 = vshrl.u32 2131351028, %v979
    %v986 = vor.u32 %v984, %v985
    %v987 = vshll.u32 2131351028, %v978
    %v988 = vshrl.u32 2102212464, %v979
    %v989 = vor.u32 %v987, %v988
    %v990 = vshll.u32 2102212464, %v978
    %v991 = vshrl.u32 920167782, %v979
    %v992 = vor.u32 %v990, %v991
    %v993 = vshll.u32 920167782, %v978
    %v994 = vshrl.u32 1326507024, %v979
    %v995 = vor.u32 %v993, %v994
    %vm996 = vcmp.lt.s32.totalorder %v977, 1
    %vm997 = vcmp.lt.s32.totalorder %v977, 2
    %vm998 = vcmp.lt.s32.totalorder %v977, 3
    %vm999 = vcmp.lt.s32.totalorder %v977, 4
    %v1000 = vsel %vm996, %v980, %v983
    %v1001 = vsel %vm999, %v989, 2102212464
    %v1002 = vsel %vm998, %v986, %v1001
    %v1003 = vsel %vm997, %v1000, %v1002
    %v1004 = vsel %vm996, %v983, %v986
    %v1005 = vsel %vm999, %v992, 920167782
    %v1006 = vsel %vm998, %v989, %v1005
    %v1007 = vsel %vm997, %v1004, %v1006
    %v1008 = vsel %vm996, %v986, %v989
    %v1009 = vsel %vm999, %v995, 1326507024
    %v1010 = vsel %vm998, %v992, %v1009
    %v1011 = vsel %vm997, %v1008, %v1010
    %v1012 = vshll.u32 %v972, 8
    %v1013 = vmul.u32.u64.compose %v1012, %v1011
    %v1014 = vextract.low.u32 %v1013
    %v1015 = vextract.high.u32 %v1013
    %v1016 = vmul.u32.u64.compose %v1012, %v1007
    %v1017 = vextract.low.u32 %v1016
    %v1018 = vextract.high.u32 %v1016
    %v1019 = vmul.u32 %v1012, %v1003
    %v1020 = vadd.s32 %v1015, %v1017
    %vm1021 = vc.u32 %v1015, %v1017
    %v1022 = vadd.s32 %v1018, 1
    %v1023 = vsel %vm1021, %v1022, %v1018
    %v1024 = vadd.s32 %v1019, %v1023
    %v1025 = vadd.s32 %v1024, 536870912
    %v1026 = vshrl.u32 %v1025, 30
    %v1027 = vshll.u32 %v1026, 30
    %v1028 = vsub.s32 %v1024, %v1027
    %vm1029 = vcmp.lt.s32.totalorder %v1028, 0
    %v1030 = vsub.s32 0, %v1028
    %v1031 = vsel %vm1029, %v1030, %v1028
    %v1032 = vclz %v1031
    %v1033 = vsub.s32 %v1032, 2
    %vm1034 = vcmp.gt.s32.totalorder 0, %v1033
    %v1035 = vsel %vm1034, 0, %v1033
    %v1036 = vsub.s32 32, %v1035
    %v1037 = vshll.u32 %v1028, %v1035
    %v1038 = vshrl.u32 %v1020, %v1036
    %v1039 = vor.u32 %v1037, %v1038
    %v1040 = vsub.s32 4294967266, %v1035
    %v1041 = vadd.s32 %v1040, 127
    %v1042 = vshll.u32 %v1041, 23
    %v1043 = vor.u32 4788187, %v1042
    %v1044 = vand.u32 2147483647, %v1043
    %v1046 = vcvt.s32.f32 %v1039
    %v1047 = vmul.f32 %v1046, %v1044
    %v1048 = vxor.u32 %v1047, 2147483648
    %v1049 = vsel %vm966, %v1048, %v1047
    %v1050 = vsub.s32 4, %v1026
    %v1051 = vsel %vm966, %v1050, %v1026
    %v1052 = vsel %vm965, %v200, %v1049
    %v1053 = vsel %vm965, 0, %v1051
    %v1054 = vcosq.f32.pop %v1052
    %v1055 = vsinq.f32.pop %v1052
    %vm1056 = vweird.f32 %v200
    %v1057 = vand.u32 %v1053, 3
    %vm1058 = vcmp.lt.s32.totalorder %v1057, 2
    %vm1059 = vcmp.eq.s32.totalorder %v1057, 0
    %v1060 = vxor.u32 %v1055, 2147483648
    %v1061 = vsel %vm1059, %v1054, %v1060
    %vm1062 = vcmp.eq.s32.totalorder %v1057, 2
    %v1063 = vxor.u32 %v1054, 2147483648
    %v1064 = vsel %vm1062, %v1063, %v1055
    %v1065 = vsel %vm1058, %v1061, %v1064
    %v1066 = vsel %vm1056, nan, %v1065
    %v1067 = vand.u32 2147483647, %v205
    %vm1068 = vcmp.le.f32.partialorder %v1067, 0.7853982
    %vm1069 = vcmp.lt.s32.totalorder %v205, 0
    %v1070 = vand.u32 %v205, 2139095040
    %v1071 = vshrl.u32 %v1070, 23
    %v1072 = vsub.s32 %v1071, 127
    %v1073 = vand.u32 2147483647, %v205
    %v1074 = vand.u32 %v1073, 8388607
    %v1075 = vor.u32 %v1074, 8388608
    %v1076 = vsub.s32 0, %v1075
    %v1077 = vadd.s32 %v1072, 1
    %vm1078 = vcmp.gt.s32.totalorder %v1077, 0
    %v1079 = vsel %vm1078, %v1077, 0
    %v1080 = vshrl.u32 %v1079, 5
    %v1081 = vand.u32 %v1079, 31
    %v1082 = vsub.s32 32, %v1081
    %v1083 = vshrl.u32 683565275, %v1082
    %v1084 = vshll.u32 683565275, %v1081
    %v1085 = vshrl.u32 2475754826, %v1082
    %v1086 = vor.u32 %v1084, %v1085
    %v1087 = vshll.u32 2475754826, %v1081
    %v1088 = vshrl.u32 2131351028, %v1082
    %v1089 = vor.u32 %v1087, %v1088
    %v1090 = vshll.u32 2131351028, %v1081
    %v1091 = vshrl.u32 2102212464, %v1082
    %v1092 = vor.u32 %v1090, %v1091
    %v1093 = vshll.u32 2102212464, %v1081
    %v1094 = vshrl.u32 920167782, %v1082
    %v1095 = vor.u32 %v1093, %v1094
    %v1096 = vshll.u32 920167782, %v1081
    %v1097 = vshrl.u32 1326507024, %v1082
    %v1098 = vor.u32 %v1096, %v1097
    %vm1099 = vcmp.lt.s32.totalorder %v1080, 1
    %vm1100 = vcmp.lt.s32.totalorder %v1080, 2
    %vm1101 = vcmp.lt.s32.totalorder %v1080, 3
    %vm1102 = vcmp.lt.s32.totalorder %v1080, 4
    %v1103 = vsel %vm1099, %v1083, %v1086
    %v1104 = vsel %vm1102, %v1092, 2102212464
    %v1105 = vsel %vm1101, %v1089, %v1104
    %v1106 = vsel %vm1100, %v1103, %v1105
    %v1107 = vsel %vm1099, %v1086, %v1089
    %v1108 = vsel %vm1102, %v1095, 920167782
    %v1109 = vsel %vm1101, %v1092, %v1108
    %v1110 = vsel %vm1100, %v1107, %v1109
    %v1111 = vsel %vm1099, %v1089, %v1092
    %v1112 = vsel %vm1102, %v1098, 1326507024
    %v1113 = vsel %vm1101, %v1095, %v1112
    %v1114 = vsel %vm1100, %v1111, %v1113
    %v1115 = vshll.u32 %v1075, 8
    %v1116 = vmul.u32.u64.compose %v1115, %v1114
    %v1117 = vextract.low.u32 %v1116
    %v1118 = vextract.high.u32 %v1116
    %v1119 = vmul.u32.u64.compose %v1115, %v1110
    %v1120 = vextract.low.u32 %v1119
    %v1121 = vextract.high.u32 %v1119
    %v1122 = vmul.u32 %v1115, %v1106
    %v1123 = vadd.s32 %v1118, %v1120
    %vm1124 = vc.u32 %v1118, %v1120
    %v1125 = vadd.s32 %v1121, 1
    %v1126 = vsel %vm1124, %v1125, %v1121
    %v1127 = vadd.s32 %v1122, %v1126
    %v1128 = vadd.s32 %v1127, 536870912
    %v1129 = vshrl.u32 %v1128, 30
    %v1130 = vshll.u32 %v1129, 30
    %v1131 = vsub.s32 %v1127, %v1130
    %vm1132 = vcmp.lt.s32.totalorder %v1131, 0
    %v1133 = vsub.s32 0, %v1131
    %v1134 = vsel %vm1132, %v1133, %v1131
    %v1135 = vclz %v1134
    %v1136 = vsub.s32 %v1135, 2
    %vm1137 = vcmp.gt.s32.totalorder 0, %v1136
    %v1138 = vsel %vm1137, 0, %v1136
    %v1139 = vsub.s32 32, %v1138
    %v1140 = vshll.u32 %v1131, %v1138
    %v1141 = vshrl.u32 %v1123, %v1139
    %v1142 = vor.u32 %v1140, %v1141
    %v1143 = vsub.s32 4294967266, %v1138
    %v1144 = vadd.s32 %v1143, 127
    %v1145 = vshll.u32 %v1144, 23
    %v1146 = vor.u32 4788187, %v1145
    %v1147 = vand.u32 2147483647, %v1146
    %v1149 = vcvt.s32.f32 %v1142
    %v1150 = vmul.f32 %v1149, %v1147
    %v1151 = vxor.u32 %v1150, 2147483648
    %v1152 = vsel %vm1069, %v1151, %v1150
    %v1153 = vsub.s32 4, %v1129
    %v1154 = vsel %vm1069, %v1153, %v1129
    %v1155 = vsel %vm1068, %v205, %v1152
    %v1156 = vsel %vm1068, 0, %v1154
    %v1157 = vcosq.f32.pop %v1155
    %v1158 = vsinq.f32.pop %v1155
    %vm1159 = vweird.f32 %v205
    %v1160 = vand.u32 %v1156, 3
    %vm1161 = vcmp.lt.s32.totalorder %v1160, 2
    %vm1162 = vcmp.eq.s32.totalorder %v1160, 0
    %v1163 = vxor.u32 %v1158, 2147483648
    %v1164 = vsel %vm1162, %v1157, %v1163
    %vm1165 = vcmp.eq.s32.totalorder %v1160, 2
    %v1166 = vxor.u32 %v1157, 2147483648
    %v1167 = vsel %vm1165, %v1166, %v1158
    %v1168 = vsel %vm1161, %v1164, %v1167
    %v1169 = vsel %vm1159, nan, %v1168
    %v1170 = vand.u32 2147483647, %v210
    %vm1171 = vcmp.le.f32.partialorder %v1170, 0.7853982
    %vm1172 = vcmp.lt.s32.totalorder %v210, 0
    %v1173 = vand.u32 %v210, 2139095040
    %v1174 = vshrl.u32 %v1173, 23
    %v1175 = vsub.s32 %v1174, 127
    %v1176 = vand.u32 2147483647, %v210
    %v1177 = vand.u32 %v1176, 8388607
    %v1178 = vor.u32 %v1177, 8388608
    %v1179 = vsub.s32 0, %v1178
    %v1180 = vadd.s32 %v1175, 1
    %vm1181 = vcmp.gt.s32.totalorder %v1180, 0
    %v1182 = vsel %vm1181, %v1180, 0
    %v1183 = vshrl.u32 %v1182, 5
    %v1184 = vand.u32 %v1182, 31
    %v1185 = vsub.s32 32, %v1184
    %v1186 = vshrl.u32 683565275, %v1185
    %v1187 = vshll.u32 683565275, %v1184
    %v1188 = vshrl.u32 2475754826, %v1185
    %v1189 = vor.u32 %v1187, %v1188
    %v1190 = vshll.u32 2475754826, %v1184
    %v1191 = vshrl.u32 2131351028, %v1185
    %v1192 = vor.u32 %v1190, %v1191
    %v1193 = vshll.u32 2131351028, %v1184
    %v1194 = vshrl.u32 2102212464, %v1185
    %v1195 = vor.u32 %v1193, %v1194
    %v1196 = vshll.u32 2102212464, %v1184
    %v1197 = vshrl.u32 920167782, %v1185
    %v1198 = vor.u32 %v1196, %v1197
    %v1199 = vshll.u32 920167782, %v1184
    %v1200 = vshrl.u32 1326507024, %v1185
    %v1201 = vor.u32 %v1199, %v1200
    %vm1202 = vcmp.lt.s32.totalorder %v1183, 1
    %vm1203 = vcmp.lt.s32.totalorder %v1183, 2
    %vm1204 = vcmp.lt.s32.totalorder %v1183, 3
    %vm1205 = vcmp.lt.s32.totalorder %v1183, 4
    %v1206 = vsel %vm1202, %v1186, %v1189
    %v1207 = vsel %vm1205, %v1195, 2102212464
    %v1208 = vsel %vm1204, %v1192, %v1207
    %v1209 = vsel %vm1203, %v1206, %v1208
    %v1210 = vsel %vm1202, %v1189, %v1192
    %v1211 = vsel %vm1205, %v1198, 920167782
    %v1212 = vsel %vm1204, %v1195, %v1211
    %v1213 = vsel %vm1203, %v1210, %v1212
    %v1214 = vsel %vm1202, %v1192, %v1195
    %v1215 = vsel %vm1205, %v1201, 1326507024
    %v1216 = vsel %vm1204, %v1198, %v1215
    %v1217 = vsel %vm1203, %v1214, %v1216
    %v1218 = vshll.u32 %v1178, 8
    %v1219 = vmul.u32.u64.compose %v1218, %v1217
    %v1220 = vextract.low.u32 %v1219
    %v1221 = vextract.high.u32 %v1219
    %v1222 = vmul.u32.u64.compose %v1218, %v1213
    %v1223 = vextract.low.u32 %v1222
    %v1224 = vextract.high.u32 %v1222
    %v1225 = vmul.u32 %v1218, %v1209
    %v1226 = vadd.s32 %v1221, %v1223
    %vm1227 = vc.u32 %v1221, %v1223
    %v1228 = vadd.s32 %v1224, 1
    %v1229 = vsel %vm1227, %v1228, %v1224
    %v1230 = vadd.s32 %v1225, %v1229
    %v1231 = vadd.s32 %v1230, 536870912
    %v1232 = vshrl.u32 %v1231, 30
    %v1233 = vshll.u32 %v1232, 30
    %v1234 = vsub.s32 %v1230, %v1233
    %vm1235 = vcmp.lt.s32.totalorder %v1234, 0
    %v1236 = vsub.s32 0, %v1234
    %v1237 = vsel %vm1235, %v1236, %v1234
    %v1238 = vclz %v1237
    %v1239 = vsub.s32 %v1238, 2
    %vm1240 = vcmp.gt.s32.totalorder 0, %v1239
    %v1241 = vsel %vm1240, 0, %v1239
    %v1242 = vsub.s32 32, %v1241
    %v1243 = vshll.u32 %v1234, %v1241
    %v1244 = vshrl.u32 %v1226, %v1242
    %v1245 = vor.u32 %v1243, %v1244
    %v1246 = vsub.s32 4294967266, %v1241
    %v1247 = vadd.s32 %v1246, 127
    %v1248 = vshll.u32 %v1247, 23
    %v1249 = vor.u32 4788187, %v1248
    %v1250 = vand.u32 2147483647, %v1249
    %v1252 = vcvt.s32.f32 %v1245
    %v1253 = vmul.f32 %v1252, %v1250
    %v1254 = vxor.u32 %v1253, 2147483648
    %v1255 = vsel %vm1172, %v1254, %v1253
    %v1256 = vsub.s32 4, %v1232
    %v1257 = vsel %vm1172, %v1256, %v1232
    %v1258 = vsel %vm1171, %v210, %v1255
    %v1259 = vsel %vm1171, 0, %v1257
    %v1260 = vcosq.f32.pop %v1258
    %v1261 = vsinq.f32.pop %v1258
    %vm1262 = vweird.f32 %v210
    %v1263 = vand.u32 %v1259, 3
    %vm1264 = vcmp.lt.s32.totalorder %v1263, 2
    %vm1265 = vcmp.eq.s32.totalorder %v1263, 0
    %v1266 = vxor.u32 %v1261, 2147483648
    %v1267 = vsel %vm1265, %v1260, %v1266
    %vm1268 = vcmp.eq.s32.totalorder %v1263, 2
    %v1269 = vxor.u32 %v1260, 2147483648
    %v1270 = vsel %vm1268, %v1269, %v1261
    %v1271 = vsel %vm1264, %v1267, %v1270
    %v1272 = vsel %vm1262, nan, %v1271
    %v1273 = vand.u32 2147483647, %v215
    %vm1274 = vcmp.le.f32.partialorder %v1273, 0.7853982
    %vm1275 = vcmp.lt.s32.totalorder %v215, 0
    %v1276 = vand.u32 %v215, 2139095040
    %v1277 = vshrl.u32 %v1276, 23
    %v1278 = vsub.s32 %v1277, 127
    %v1279 = vand.u32 2147483647, %v215
    %v1280 = vand.u32 %v1279, 8388607
    %v1281 = vor.u32 %v1280, 8388608
    %v1282 = vsub.s32 0, %v1281
    %v1283 = vadd.s32 %v1278, 1
    %vm1284 = vcmp.gt.s32.totalorder %v1283, 0
    %v1285 = vsel %vm1284, %v1283, 0
    %v1286 = vshrl.u32 %v1285, 5
    %v1287 = vand.u32 %v1285, 31
    %v1288 = vsub.s32 32, %v1287
    %v1289 = vshrl.u32 683565275, %v1288
    %v1290 = vshll.u32 683565275, %v1287
    %v1291 = vshrl.u32 2475754826, %v1288
    %v1292 = vor.u32 %v1290, %v1291
    %v1293 = vshll.u32 2475754826, %v1287
    %v1294 = vshrl.u32 2131351028, %v1288
    %v1295 = vor.u32 %v1293, %v1294
    %v1296 = vshll.u32 2131351028, %v1287
    %v1297 = vshrl.u32 2102212464, %v1288
    %v1298 = vor.u32 %v1296, %v1297
    %v1299 = vshll.u32 2102212464, %v1287
    %v1300 = vshrl.u32 920167782, %v1288
    %v1301 = vor.u32 %v1299, %v1300
    %v1302 = vshll.u32 920167782, %v1287
    %v1303 = vshrl.u32 1326507024, %v1288
    %v1304 = vor.u32 %v1302, %v1303
    %vm1305 = vcmp.lt.s32.totalorder %v1286, 1
    %vm1306 = vcmp.lt.s32.totalorder %v1286, 2
    %vm1307 = vcmp.lt.s32.totalorder %v1286, 3
    %vm1308 = vcmp.lt.s32.totalorder %v1286, 4
    %v1309 = vsel %vm1305, %v1289, %v1292
    %v1310 = vsel %vm1308, %v1298, 2102212464
    %v1311 = vsel %vm1307, %v1295, %v1310
    %v1312 = vsel %vm1306, %v1309, %v1311
    %v1313 = vsel %vm1305, %v1292, %v1295
    %v1314 = vsel %vm1308, %v1301, 920167782
    %v1315 = vsel %vm1307, %v1298, %v1314
    %v1316 = vsel %vm1306, %v1313, %v1315
    %v1317 = vsel %vm1305, %v1295, %v1298
    %v1318 = vsel %vm1308, %v1304, 1326507024
    %v1319 = vsel %vm1307, %v1301, %v1318
    %v1320 = vsel %vm1306, %v1317, %v1319
    %v1321 = vshll.u32 %v1281, 8
    %v1322 = vmul.u32.u64.compose %v1321, %v1320
    %v1323 = vextract.low.u32 %v1322
    %v1324 = vextract.high.u32 %v1322
    %v1325 = vmul.u32.u64.compose %v1321, %v1316
    %v1326 = vextract.low.u32 %v1325
    %v1327 = vextract.high.u32 %v1325
    %v1328 = vmul.u32 %v1321, %v1312
    %v1329 = vadd.s32 %v1324, %v1326
    %vm1330 = vc.u32 %v1324, %v1326
    %v1331 = vadd.s32 %v1327, 1
    %v1332 = vsel %vm1330, %v1331, %v1327
    %v1333 = vadd.s32 %v1328, %v1332
    %v1334 = vadd.s32 %v1333, 536870912
    %v1335 = vshrl.u32 %v1334, 30
    %v1336 = vshll.u32 %v1335, 30
    %v1337 = vsub.s32 %v1333, %v1336
    %vm1338 = vcmp.lt.s32.totalorder %v1337, 0
    %v1339 = vsub.s32 0, %v1337
    %v1340 = vsel %vm1338, %v1339, %v1337
    %v1341 = vclz %v1340
    %v1342 = vsub.s32 %v1341, 2
    %vm1343 = vcmp.gt.s32.totalorder 0, %v1342
    %v1344 = vsel %vm1343, 0, %v1342
    %v1345 = vsub.s32 32, %v1344
    %v1346 = vshll.u32 %v1337, %v1344
    %v1347 = vshrl.u32 %v1329, %v1345
    %v1348 = vor.u32 %v1346, %v1347
    %v1349 = vsub.s32 4294967266, %v1344
    %v1350 = vadd.s32 %v1349, 127
    %v1351 = vshll.u32 %v1350, 23
    %v1352 = vor.u32 4788187, %v1351
    %v1353 = vand.u32 2147483647, %v1352
    %v1355 = vcvt.s32.f32 %v1348
    %v1356 = vmul.f32 %v1355, %v1353
    %v1357 = vxor.u32 %v1356, 2147483648
    %v1358 = vsel %vm1275, %v1357, %v1356
    %v1359 = vsub.s32 4, %v1335
    %v1360 = vsel %vm1275, %v1359, %v1335
    %v1361 = vsel %vm1274, %v215, %v1358
    %v1362 = vsel %vm1274, 0, %v1360
    %v1363 = vcosq.f32.pop %v1361
    %v1364 = vsinq.f32.pop %v1361
    %vm1365 = vweird.f32 %v215
    %v1366 = vand.u32 %v1362, 3
    %vm1367 = vcmp.lt.s32.totalorder %v1366, 2
    %vm1368 = vcmp.eq.s32.totalorder %v1366, 0
    %v1369 = vxor.u32 %v1364, 2147483648
    %v1370 = vsel %vm1368, %v1363, %v1369
    %vm1371 = vcmp.eq.s32.totalorder %v1366, 2
    %v1372 = vxor.u32 %v1363, 2147483648
    %v1373 = vsel %vm1371, %v1372, %v1364
    %v1374 = vsel %vm1367, %v1370, %v1373
    %v1375 = vsel %vm1365, nan, %v1374
    %v1376 = vand.u32 2147483647, %v220
    %vm1377 = vcmp.le.f32.partialorder %v1376, 0.7853982
    %vm1378 = vcmp.lt.s32.totalorder %v220, 0
    %v1379 = vand.u32 %v220, 2139095040
    %v1380 = vshrl.u32 %v1379, 23
    %v1381 = vsub.s32 %v1380, 127
    %v1382 = vand.u32 2147483647, %v220
    %v1383 = vand.u32 %v1382, 8388607
    %v1384 = vor.u32 %v1383, 8388608
    %v1385 = vsub.s32 0, %v1384
    %v1386 = vadd.s32 %v1381, 1
    %vm1387 = vcmp.gt.s32.totalorder %v1386, 0
    %v1388 = vsel %vm1387, %v1386, 0
    %v1389 = vshrl.u32 %v1388, 5
    %v1390 = vand.u32 %v1388, 31
    %v1391 = vsub.s32 32, %v1390
    %v1392 = vshrl.u32 683565275, %v1391
    %v1393 = vshll.u32 683565275, %v1390
    %v1394 = vshrl.u32 2475754826, %v1391
    %v1395 = vor.u32 %v1393, %v1394
    %v1396 = vshll.u32 2475754826, %v1390
    %v1397 = vshrl.u32 2131351028, %v1391
    %v1398 = vor.u32 %v1396, %v1397
    %v1399 = vshll.u32 2131351028, %v1390
    %v1400 = vshrl.u32 2102212464, %v1391
    %v1401 = vor.u32 %v1399, %v1400
    %v1402 = vshll.u32 2102212464, %v1390
    %v1403 = vshrl.u32 920167782, %v1391
    %v1404 = vor.u32 %v1402, %v1403
    %v1405 = vshll.u32 920167782, %v1390
    %v1406 = vshrl.u32 1326507024, %v1391
    %v1407 = vor.u32 %v1405, %v1406
    %vm1408 = vcmp.lt.s32.totalorder %v1389, 1
    %vm1409 = vcmp.lt.s32.totalorder %v1389, 2
    %vm1410 = vcmp.lt.s32.totalorder %v1389, 3
    %vm1411 = vcmp.lt.s32.totalorder %v1389, 4
    %v1412 = vsel %vm1408, %v1392, %v1395
    %v1413 = vsel %vm1411, %v1401, 2102212464
    %v1414 = vsel %vm1410, %v1398, %v1413
    %v1415 = vsel %vm1409, %v1412, %v1414
    %v1416 = vsel %vm1408, %v1395, %v1398
    %v1417 = vsel %vm1411, %v1404, 920167782
    %v1418 = vsel %vm1410, %v1401, %v1417
    %v1419 = vsel %vm1409, %v1416, %v1418
    %v1420 = vsel %vm1408, %v1398, %v1401
    %v1421 = vsel %vm1411, %v1407, 1326507024
    %v1422 = vsel %vm1410, %v1404, %v1421
    %v1423 = vsel %vm1409, %v1420, %v1422
    %v1424 = vshll.u32 %v1384, 8
    %v1425 = vmul.u32.u64.compose %v1424, %v1423
    %v1426 = vextract.low.u32 %v1425
    %v1427 = vextract.high.u32 %v1425
    %v1428 = vmul.u32.u64.compose %v1424, %v1419
    %v1429 = vextract.low.u32 %v1428
    %v1430 = vextract.high.u32 %v1428
    %v1431 = vmul.u32 %v1424, %v1415
    %v1432 = vadd.s32 %v1427, %v1429
    %vm1433 = vc.u32 %v1427, %v1429
    %v1434 = vadd.s32 %v1430, 1
    %v1435 = vsel %vm1433, %v1434, %v1430
    %v1436 = vadd.s32 %v1431, %v1435
    %v1437 = vadd.s32 %v1436, 536870912
    %v1438 = vshrl.u32 %v1437, 30
    %v1439 = vshll.u32 %v1438, 30
    %v1440 = vsub.s32 %v1436, %v1439
    %vm1441 = vcmp.lt.s32.totalorder %v1440, 0
    %v1442 = vsub.s32 0, %v1440
    %v1443 = vsel %vm1441, %v1442, %v1440
    %v1444 = vclz %v1443
    %v1445 = vsub.s32 %v1444, 2
    %vm1446 = vcmp.gt.s32.totalorder 0, %v1445
    %v1447 = vsel %vm1446, 0, %v1445
    %v1448 = vsub.s32 32, %v1447
    %v1449 = vshll.u32 %v1440, %v1447
    %v1450 = vshrl.u32 %v1432, %v1448
    %v1451 = vor.u32 %v1449, %v1450
    %v1452 = vsub.s32 4294967266, %v1447
    %v1453 = vadd.s32 %v1452, 127
    %v1454 = vshll.u32 %v1453, 23
    %v1455 = vor.u32 4788187, %v1454
    %v1456 = vand.u32 2147483647, %v1455
    %v1458 = vcvt.s32.f32 %v1451
    %v1459 = vmul.f32 %v1458, %v1456
    %v1460 = vxor.u32 %v1459, 2147483648
    %v1461 = vsel %vm1378, %v1460, %v1459
    %v1462 = vsub.s32 4, %v1438
    %v1463 = vsel %vm1378, %v1462, %v1438
    %v1464 = vsel %vm1377, %v220, %v1461
    %v1465 = vsel %vm1377, 0, %v1463
    %v1466 = vcosq.f32.pop %v1464
    %v1467 = vsinq.f32.pop %v1464
    %vm1468 = vweird.f32 %v220
    %v1469 = vand.u32 %v1465, 3
    %vm1470 = vcmp.lt.s32.totalorder %v1469, 2
    %vm1471 = vcmp.eq.s32.totalorder %v1469, 0
    %v1472 = vxor.u32 %v1467, 2147483648
    %v1473 = vsel %vm1471, %v1466, %v1472
    %vm1474 = vcmp.eq.s32.totalorder %v1469, 2
    %v1475 = vxor.u32 %v1466, 2147483648
    %v1476 = vsel %vm1474, %v1475, %v1467
    %v1477 = vsel %vm1470, %v1473, %v1476
    %v1478 = vsel %vm1468, nan, %v1477
    %v1479 = vand.u32 2147483647, %v225
    %vm1480 = vcmp.le.f32.partialorder %v1479, 0.7853982
    %vm1481 = vcmp.lt.s32.totalorder %v225, 0
    %v1482 = vand.u32 %v225, 2139095040
    %v1483 = vshrl.u32 %v1482, 23
    %v1484 = vsub.s32 %v1483, 127
    %v1485 = vand.u32 2147483647, %v225
    %v1486 = vand.u32 %v1485, 8388607
    %v1487 = vor.u32 %v1486, 8388608
    %v1488 = vsub.s32 0, %v1487
    %v1489 = vadd.s32 %v1484, 1
    %vm1490 = vcmp.gt.s32.totalorder %v1489, 0
    %v1491 = vsel %vm1490, %v1489, 0
    %v1492 = vshrl.u32 %v1491, 5
    %v1493 = vand.u32 %v1491, 31
    %v1494 = vsub.s32 32, %v1493
    %v1495 = vshrl.u32 683565275, %v1494
    %v1496 = vshll.u32 683565275, %v1493
    %v1497 = vshrl.u32 2475754826, %v1494
    %v1498 = vor.u32 %v1496, %v1497
    %v1499 = vshll.u32 2475754826, %v1493
    %v1500 = vshrl.u32 2131351028, %v1494
    %v1501 = vor.u32 %v1499, %v1500
    %v1502 = vshll.u32 2131351028, %v1493
    %v1503 = vshrl.u32 2102212464, %v1494
    %v1504 = vor.u32 %v1502, %v1503
    %v1505 = vshll.u32 2102212464, %v1493
    %v1506 = vshrl.u32 920167782, %v1494
    %v1507 = vor.u32 %v1505, %v1506
    %v1508 = vshll.u32 920167782, %v1493
    %v1509 = vshrl.u32 1326507024, %v1494
    %v1510 = vor.u32 %v1508, %v1509
    %vm1511 = vcmp.lt.s32.totalorder %v1492, 1
    %vm1512 = vcmp.lt.s32.totalorder %v1492, 2
    %vm1513 = vcmp.lt.s32.totalorder %v1492, 3
    %vm1514 = vcmp.lt.s32.totalorder %v1492, 4
    %v1515 = vsel %vm1511, %v1495, %v1498
    %v1516 = vsel %vm1514, %v1504, 2102212464
    %v1517 = vsel %vm1513, %v1501, %v1516
    %v1518 = vsel %vm1512, %v1515, %v1517
    %v1519 = vsel %vm1511, %v1498, %v1501
    %v1520 = vsel %vm1514, %v1507, 920167782
    %v1521 = vsel %vm1513, %v1504, %v1520
    %v1522 = vsel %vm1512, %v1519, %v1521
    %v1523 = vsel %vm1511, %v1501, %v1504
    %v1524 = vsel %vm1514, %v1510, 1326507024
    %v1525 = vsel %vm1513, %v1507, %v1524
    %v1526 = vsel %vm1512, %v1523, %v1525
    %v1527 = vshll.u32 %v1487, 8
    %v1528 = vmul.u32.u64.compose %v1527, %v1526
    %v1529 = vextract.low.u32 %v1528
    %v1530 = vextract.high.u32 %v1528
    %v1531 = vmul.u32.u64.compose %v1527, %v1522
    %v1532 = vextract.low.u32 %v1531
    %v1533 = vextract.high.u32 %v1531
    %v1534 = vmul.u32 %v1527, %v1518
    %v1535 = vadd.s32 %v1530, %v1532
    %vm1536 = vc.u32 %v1530, %v1532
    %v1537 = vadd.s32 %v1533, 1
    %v1538 = vsel %vm1536, %v1537, %v1533
    %v1539 = vadd.s32 %v1534, %v1538
    %v1540 = vadd.s32 %v1539, 536870912
    %v1541 = vshrl.u32 %v1540, 30
    %v1542 = vshll.u32 %v1541, 30
    %v1543 = vsub.s32 %v1539, %v1542
    %vm1544 = vcmp.lt.s32.totalorder %v1543, 0
    %v1545 = vsub.s32 0, %v1543
    %v1546 = vsel %vm1544, %v1545, %v1543
    %v1547 = vclz %v1546
    %v1548 = vsub.s32 %v1547, 2
    %vm1549 = vcmp.gt.s32.totalorder 0, %v1548
    %v1550 = vsel %vm1549, 0, %v1548
    %v1551 = vsub.s32 32, %v1550
    %v1552 = vshll.u32 %v1543, %v1550
    %v1553 = vshrl.u32 %v1535, %v1551
    %v1554 = vor.u32 %v1552, %v1553
    %v1555 = vsub.s32 4294967266, %v1550
    %v1556 = vadd.s32 %v1555, 127
    %v1557 = vshll.u32 %v1556, 23
    %v1558 = vor.u32 4788187, %v1557
    %v1559 = vand.u32 2147483647, %v1558
    %v1561 = vcvt.s32.f32 %v1554
    %v1562 = vmul.f32 %v1561, %v1559
    %v1563 = vxor.u32 %v1562, 2147483648
    %v1564 = vsel %vm1481, %v1563, %v1562
    %v1565 = vsub.s32 4, %v1541
    %v1566 = vsel %vm1481, %v1565, %v1541
    %v1567 = vsel %vm1480, %v225, %v1564
    %v1568 = vsel %vm1480, 0, %v1566
    %v1569 = vcosq.f32.pop %v1567
    %v1570 = vsinq.f32.pop %v1567
    %vm1571 = vweird.f32 %v225
    %v1572 = vand.u32 %v1568, 3
    %vm1573 = vcmp.lt.s32.totalorder %v1572, 2
    %vm1574 = vcmp.eq.s32.totalorder %v1572, 0
    %v1575 = vxor.u32 %v1570, 2147483648
    %v1576 = vsel %vm1574, %v1569, %v1575
    %vm1577 = vcmp.eq.s32.totalorder %v1572, 2
    %v1578 = vxor.u32 %v1569, 2147483648
    %v1579 = vsel %vm1577, %v1578, %v1570
    %v1580 = vsel %vm1573, %v1576, %v1579
    %v1581 = vsel %vm1571, nan, %v1580
    %v1582 = vand.u32 2147483647, %v230
    %vm1583 = vcmp.le.f32.partialorder %v1582, 0.7853982
    %vm1584 = vcmp.lt.s32.totalorder %v230, 0
    %v1585 = vand.u32 %v230, 2139095040
    %v1586 = vshrl.u32 %v1585, 23
    %v1587 = vsub.s32 %v1586, 127
    %v1588 = vand.u32 2147483647, %v230
    %v1589 = vand.u32 %v1588, 8388607
    %v1590 = vor.u32 %v1589, 8388608
    %v1591 = vsub.s32 0, %v1590
    %v1592 = vadd.s32 %v1587, 1
    %vm1593 = vcmp.gt.s32.totalorder %v1592, 0
    %v1594 = vsel %vm1593, %v1592, 0
    %v1595 = vshrl.u32 %v1594, 5
    %v1596 = vand.u32 %v1594, 31
    %v1597 = vsub.s32 32, %v1596
    %v1598 = vshrl.u32 683565275, %v1597
    %v1599 = vshll.u32 683565275, %v1596
    %v1600 = vshrl.u32 2475754826, %v1597
    %v1601 = vor.u32 %v1599, %v1600
    %v1602 = vshll.u32 2475754826, %v1596
    %v1603 = vshrl.u32 2131351028, %v1597
    %v1604 = vor.u32 %v1602, %v1603
    %v1605 = vshll.u32 2131351028, %v1596
    %v1606 = vshrl.u32 2102212464, %v1597
    %v1607 = vor.u32 %v1605, %v1606
    %v1608 = vshll.u32 2102212464, %v1596
    %v1609 = vshrl.u32 920167782, %v1597
    %v1610 = vor.u32 %v1608, %v1609
    %v1611 = vshll.u32 920167782, %v1596
    %v1612 = vshrl.u32 1326507024, %v1597
    %v1613 = vor.u32 %v1611, %v1612
    %vm1614 = vcmp.lt.s32.totalorder %v1595, 1
    %vm1615 = vcmp.lt.s32.totalorder %v1595, 2
    %vm1616 = vcmp.lt.s32.totalorder %v1595, 3
    %vm1617 = vcmp.lt.s32.totalorder %v1595, 4
    %v1618 = vsel %vm1614, %v1598, %v1601
    %v1619 = vsel %vm1617, %v1607, 2102212464
    %v1620 = vsel %vm1616, %v1604, %v1619
    %v1621 = vsel %vm1615, %v1618, %v1620
    %v1622 = vsel %vm1614, %v1601, %v1604
    %v1623 = vsel %vm1617, %v1610, 920167782
    %v1624 = vsel %vm1616, %v1607, %v1623
    %v1625 = vsel %vm1615, %v1622, %v1624
    %v1626 = vsel %vm1614, %v1604, %v1607
    %v1627 = vsel %vm1617, %v1613, 1326507024
    %v1628 = vsel %vm1616, %v1610, %v1627
    %v1629 = vsel %vm1615, %v1626, %v1628
    %v1630 = vshll.u32 %v1590, 8
    %v1631 = vmul.u32.u64.compose %v1630, %v1629
    %v1632 = vextract.low.u32 %v1631
    %v1633 = vextract.high.u32 %v1631
    %v1634 = vmul.u32.u64.compose %v1630, %v1625
    %v1635 = vextract.low.u32 %v1634
    %v1636 = vextract.high.u32 %v1634
    %v1637 = vmul.u32 %v1630, %v1621
    %v1638 = vadd.s32 %v1633, %v1635
    %vm1639 = vc.u32 %v1633, %v1635
    %v1640 = vadd.s32 %v1636, 1
    %v1641 = vsel %vm1639, %v1640, %v1636
    %v1642 = vadd.s32 %v1637, %v1641
    %v1643 = vadd.s32 %v1642, 536870912
    %v1644 = vshrl.u32 %v1643, 30
    %v1645 = vshll.u32 %v1644, 30
    %v1646 = vsub.s32 %v1642, %v1645
    %vm1647 = vcmp.lt.s32.totalorder %v1646, 0
    %v1648 = vsub.s32 0, %v1646
    %v1649 = vsel %vm1647, %v1648, %v1646
    %v1650 = vclz %v1649
    %v1651 = vsub.s32 %v1650, 2
    %vm1652 = vcmp.gt.s32.totalorder 0, %v1651
    %v1653 = vsel %vm1652, 0, %v1651
    %v1654 = vsub.s32 32, %v1653
    %v1655 = vshll.u32 %v1646, %v1653
    %v1656 = vshrl.u32 %v1638, %v1654
    %v1657 = vor.u32 %v1655, %v1656
    %v1658 = vsub.s32 4294967266, %v1653
    %v1659 = vadd.s32 %v1658, 127
    %v1660 = vshll.u32 %v1659, 23
    %v1661 = vor.u32 4788187, %v1660
    %v1662 = vand.u32 2147483647, %v1661
    %v1664 = vcvt.s32.f32 %v1657
    %v1665 = vmul.f32 %v1664, %v1662
    %v1666 = vxor.u32 %v1665, 2147483648
    %v1667 = vsel %vm1584, %v1666, %v1665
    %v1668 = vsub.s32 4, %v1644
    %v1669 = vsel %vm1584, %v1668, %v1644
    %v1670 = vsel %vm1583, %v230, %v1667
    %v1671 = vsel %vm1583, 0, %v1669
    %v1672 = vcosq.f32.pop %v1670
    %v1673 = vsinq.f32.pop %v1670
    %vm1674 = vweird.f32 %v230
    %v1675 = vand.u32 %v1671, 3
    %vm1676 = vcmp.lt.s32.totalorder %v1675, 2
    %vm1677 = vcmp.eq.s32.totalorder %v1675, 0
    %v1678 = vxor.u32 %v1673, 2147483648
    %v1679 = vsel %vm1677, %v1672, %v1678
    %vm1680 = vcmp.eq.s32.totalorder %v1675, 2
    %v1681 = vxor.u32 %v1672, 2147483648
    %v1682 = vsel %vm1680, %v1681, %v1673
    %v1683 = vsel %vm1676, %v1679, %v1682
    %v1684 = vsel %vm1674, nan, %v1683
    %v1685 = vand.u32 2147483647, %v235
    %vm1686 = vcmp.le.f32.partialorder %v1685, 0.7853982
    %vm1687 = vcmp.lt.s32.totalorder %v235, 0
    %v1688 = vand.u32 %v235, 2139095040
    %v1689 = vshrl.u32 %v1688, 23
    %v1690 = vsub.s32 %v1689, 127
    %v1691 = vand.u32 2147483647, %v235
    %v1692 = vand.u32 %v1691, 8388607
    %v1693 = vor.u32 %v1692, 8388608
    %v1694 = vsub.s32 0, %v1693
    %v1695 = vadd.s32 %v1690, 1
    %vm1696 = vcmp.gt.s32.totalorder %v1695, 0
    %v1697 = vsel %vm1696, %v1695, 0
    %v1698 = vshrl.u32 %v1697, 5
    %v1699 = vand.u32 %v1697, 31
    %v1700 = vsub.s32 32, %v1699
    %v1701 = vshrl.u32 683565275, %v1700
    %v1702 = vshll.u32 683565275, %v1699
    %v1703 = vshrl.u32 2475754826, %v1700
    %v1704 = vor.u32 %v1702, %v1703
    %v1705 = vshll.u32 2475754826, %v1699
    %v1706 = vshrl.u32 2131351028, %v1700
    %v1707 = vor.u32 %v1705, %v1706
    %v1708 = vshll.u32 2131351028, %v1699
    %v1709 = vshrl.u32 2102212464, %v1700
    %v1710 = vor.u32 %v1708, %v1709
    %v1711 = vshll.u32 2102212464, %v1699
    %v1712 = vshrl.u32 920167782, %v1700
    %v1713 = vor.u32 %v1711, %v1712
    %v1714 = vshll.u32 920167782, %v1699
    %v1715 = vshrl.u32 1326507024, %v1700
    %v1716 = vor.u32 %v1714, %v1715
    %vm1717 = vcmp.lt.s32.totalorder %v1698, 1
    %vm1718 = vcmp.lt.s32.totalorder %v1698, 2
    %vm1719 = vcmp.lt.s32.totalorder %v1698, 3
    %vm1720 = vcmp.lt.s32.totalorder %v1698, 4
    %v1721 = vsel %vm1717, %v1701, %v1704
    %v1722 = vsel %vm1720, %v1710, 2102212464
    %v1723 = vsel %vm1719, %v1707, %v1722
    %v1724 = vsel %vm1718, %v1721, %v1723
    %v1725 = vsel %vm1717, %v1704, %v1707
    %v1726 = vsel %vm1720, %v1713, 920167782
    %v1727 = vsel %vm1719, %v1710, %v1726
    %v1728 = vsel %vm1718, %v1725, %v1727
    %v1729 = vsel %vm1717, %v1707, %v1710
    %v1730 = vsel %vm1720, %v1716, 1326507024
    %v1731 = vsel %vm1719, %v1713, %v1730
    %v1732 = vsel %vm1718, %v1729, %v1731
    %v1733 = vshll.u32 %v1693, 8
    %v1734 = vmul.u32.u64.compose %v1733, %v1732
    %v1735 = vextract.low.u32 %v1734
    %v1736 = vextract.high.u32 %v1734
    %v1737 = vmul.u32.u64.compose %v1733, %v1728
    %v1738 = vextract.low.u32 %v1737
    %v1739 = vextract.high.u32 %v1737
    %v1740 = vmul.u32 %v1733, %v1724
    %v1741 = vadd.s32 %v1736, %v1738
    %vm1742 = vc.u32 %v1736, %v1738
    %v1743 = vadd.s32 %v1739, 1
    %v1744 = vsel %vm1742, %v1743, %v1739
    %v1745 = vadd.s32 %v1740, %v1744
    %v1746 = vadd.s32 %v1745, 536870912
    %v1747 = vshrl.u32 %v1746, 30
    %v1748 = vshll.u32 %v1747, 30
    %v1749 = vsub.s32 %v1745, %v1748
    %vm1750 = vcmp.lt.s32.totalorder %v1749, 0
    %v1751 = vsub.s32 0, %v1749
    %v1752 = vsel %vm1750, %v1751, %v1749
    %v1753 = vclz %v1752
    %v1754 = vsub.s32 %v1753, 2
    %vm1755 = vcmp.gt.s32.totalorder 0, %v1754
    %v1756 = vsel %vm1755, 0, %v1754
    %v1757 = vsub.s32 32, %v1756
    %v1758 = vshll.u32 %v1749, %v1756
    %v1759 = vshrl.u32 %v1741, %v1757
    %v1760 = vor.u32 %v1758, %v1759
    %v1761 = vsub.s32 4294967266, %v1756
    %v1762 = vadd.s32 %v1761, 127
    %v1763 = vshll.u32 %v1762, 23
    %v1764 = vor.u32 4788187, %v1763
    %v1765 = vand.u32 2147483647, %v1764
    %v1767 = vcvt.s32.f32 %v1760
    %v1768 = vmul.f32 %v1767, %v1765
    %v1769 = vxor.u32 %v1768, 2147483648
    %v1770 = vsel %vm1687, %v1769, %v1768
    %v1771 = vsub.s32 4, %v1747
    %v1772 = vsel %vm1687, %v1771, %v1747
    %v1773 = vsel %vm1686, %v235, %v1770
    %v1774 = vsel %vm1686, 0, %v1772
    %v1775 = vcosq.f32.pop %v1773
    %v1776 = vsinq.f32.pop %v1773
    %vm1777 = vweird.f32 %v235
    %v1778 = vand.u32 %v1774, 3
    %vm1779 = vcmp.lt.s32.totalorder %v1778, 2
    %vm1780 = vcmp.eq.s32.totalorder %v1778, 0
    %v1781 = vxor.u32 %v1776, 2147483648
    %v1782 = vsel %vm1780, %v1775, %v1781
    %vm1783 = vcmp.eq.s32.totalorder %v1778, 2
    %v1784 = vxor.u32 %v1775, 2147483648
    %v1785 = vsel %vm1783, %v1784, %v1776
    %v1786 = vsel %vm1779, %v1782, %v1785
    %v1787 = vsel %vm1777, nan, %v1786
    %v1788 = vand.u32 2147483647, %v240
    %vm1789 = vcmp.le.f32.partialorder %v1788, 0.7853982
    %vm1790 = vcmp.lt.s32.totalorder %v240, 0
    %v1791 = vand.u32 %v240, 2139095040
    %v1792 = vshrl.u32 %v1791, 23
    %v1793 = vsub.s32 %v1792, 127
    %v1794 = vand.u32 2147483647, %v240
    %v1795 = vand.u32 %v1794, 8388607
    %v1796 = vor.u32 %v1795, 8388608
    %v1797 = vsub.s32 0, %v1796
    %v1798 = vadd.s32 %v1793, 1
    %vm1799 = vcmp.gt.s32.totalorder %v1798, 0
    %v1800 = vsel %vm1799, %v1798, 0
    %v1801 = vshrl.u32 %v1800, 5
    %v1802 = vand.u32 %v1800, 31
    %v1803 = vsub.s32 32, %v1802
    %v1804 = vshrl.u32 683565275, %v1803
    %v1805 = vshll.u32 683565275, %v1802
    %v1806 = vshrl.u32 2475754826, %v1803
    %v1807 = vor.u32 %v1805, %v1806
    %v1808 = vshll.u32 2475754826, %v1802
    %v1809 = vshrl.u32 2131351028, %v1803
    %v1810 = vor.u32 %v1808, %v1809
    %v1811 = vshll.u32 2131351028, %v1802
    %v1812 = vshrl.u32 2102212464, %v1803
    %v1813 = vor.u32 %v1811, %v1812
    %v1814 = vshll.u32 2102212464, %v1802
    %v1815 = vshrl.u32 920167782, %v1803
    %v1816 = vor.u32 %v1814, %v1815
    %v1817 = vshll.u32 920167782, %v1802
    %v1818 = vshrl.u32 1326507024, %v1803
    %v1819 = vor.u32 %v1817, %v1818
    %vm1820 = vcmp.lt.s32.totalorder %v1801, 1
    %vm1821 = vcmp.lt.s32.totalorder %v1801, 2
    %vm1822 = vcmp.lt.s32.totalorder %v1801, 3
    %vm1823 = vcmp.lt.s32.totalorder %v1801, 4
    %v1824 = vsel %vm1820, %v1804, %v1807
    %v1825 = vsel %vm1823, %v1813, 2102212464
    %v1826 = vsel %vm1822, %v1810, %v1825
    %v1827 = vsel %vm1821, %v1824, %v1826
    %v1828 = vsel %vm1820, %v1807, %v1810
    %v1829 = vsel %vm1823, %v1816, 920167782
    %v1830 = vsel %vm1822, %v1813, %v1829
    %v1831 = vsel %vm1821, %v1828, %v1830
    %v1832 = vsel %vm1820, %v1810, %v1813
    %v1833 = vsel %vm1823, %v1819, 1326507024
    %v1834 = vsel %vm1822, %v1816, %v1833
    %v1835 = vsel %vm1821, %v1832, %v1834
    %v1836 = vshll.u32 %v1796, 8
    %v1837 = vmul.u32.u64.compose %v1836, %v1835
    %v1838 = vextract.low.u32 %v1837
    %v1839 = vextract.high.u32 %v1837
    %v1840 = vmul.u32.u64.compose %v1836, %v1831
    %v1841 = vextract.low.u32 %v1840
    %v1842 = vextract.high.u32 %v1840
    %v1843 = vmul.u32 %v1836, %v1827
    %v1844 = vadd.s32 %v1839, %v1841
    %vm1845 = vc.u32 %v1839, %v1841
    %v1846 = vadd.s32 %v1842, 1
    %v1847 = vsel %vm1845, %v1846, %v1842
    %v1848 = vadd.s32 %v1843, %v1847
    %v1849 = vadd.s32 %v1848, 536870912
    %v1850 = vshrl.u32 %v1849, 30
    %v1851 = vshll.u32 %v1850, 30
    %v1852 = vsub.s32 %v1848, %v1851
    %vm1853 = vcmp.lt.s32.totalorder %v1852, 0
    %v1854 = vsub.s32 0, %v1852
    %v1855 = vsel %vm1853, %v1854, %v1852
    %v1856 = vclz %v1855
    %v1857 = vsub.s32 %v1856, 2
    %vm1858 = vcmp.gt.s32.totalorder 0, %v1857
    %v1859 = vsel %vm1858, 0, %v1857
    %v1860 = vsub.s32 32, %v1859
    %v1861 = vshll.u32 %v1852, %v1859
    %v1862 = vshrl.u32 %v1844, %v1860
    %v1863 = vor.u32 %v1861, %v1862
    %v1864 = vsub.s32 4294967266, %v1859
    %v1865 = vadd.s32 %v1864, 127
    %v1866 = vshll.u32 %v1865, 23
    %v1867 = vor.u32 4788187, %v1866
    %v1868 = vand.u32 2147483647, %v1867
    %v1870 = vcvt.s32.f32 %v1863
    %v1871 = vmul.f32 %v1870, %v1868
    %v1872 = vxor.u32 %v1871, 2147483648
    %v1873 = vsel %vm1790, %v1872, %v1871
    %v1874 = vsub.s32 4, %v1850
    %v1875 = vsel %vm1790, %v1874, %v1850
    %v1876 = vsel %vm1789, %v240, %v1873
    %v1877 = vsel %vm1789, 0, %v1875
    %v1878 = vcosq.f32.pop %v1876
    %v1879 = vsinq.f32.pop %v1876
    %vm1880 = vweird.f32 %v240
    %v1881 = vand.u32 %v1877, 3
    %vm1882 = vcmp.lt.s32.totalorder %v1881, 2
    %vm1883 = vcmp.eq.s32.totalorder %v1881, 0
    %v1884 = vxor.u32 %v1879, 2147483648
    %v1885 = vsel %vm1883, %v1878, %v1884
    %vm1886 = vcmp.eq.s32.totalorder %v1881, 2
    %v1887 = vxor.u32 %v1878, 2147483648
    %v1888 = vsel %vm1886, %v1887, %v1879
    %v1889 = vsel %vm1882, %v1885, %v1888
    %v1890 = vsel %vm1880, nan, %v1889
    %v1891 = vld [vmem:[%s3] sm:$0xff]
    %v1892 = vld [vmem:[%s3 + $0x8] sm:$0xff]
    %v1893 = vld [vmem:[%s3 + $0x10] sm:$0xff]
    %v1894 = vld [vmem:[%s3 + $0x18] sm:$0xff]
    %v1895 = vld [vmem:[%s4] sm:$0x1]
    %v1897 = vlaneseq
    %v1898 = vshrl.u32 %v1897, 7
    %v1899 = vsub.s32 0, %v1898
    %v1900 = vrot.slane %v1895, %v1899
    %vm1902 = vcmask 261120
    %v1904 = vsel %vm1902, %v345, 0
    %v1907 = vsel %vm1902, %v448, 0
    %v1910 = vsel %vm1902, %v551, 0
    %v1913 = vsel %vm1902, %v654, 0
    %v1916 = vsel %vm1902, %v757, 0
    %v1919 = vsel %vm1902, %v860, 0
    %v1922 = vsel %vm1902, %v963, 0
    %v1925 = vsel %vm1902, %v1066, 0
    %v1928 = vsel %vm1902, %v1169, 0
    %v1931 = vsel %vm1902, %v1272, 0
    %v1934 = vsel %vm1902, %v1375, 0
    %v1937 = vsel %vm1902, %v1478, 0
    %v1940 = vsel %vm1902, %v1581, 0
    %v1943 = vsel %vm1902, %v1684, 0
    %v1946 = vsel %vm1902, %v1787, 0
    %v1949 = vsel %vm1902, %v1890, 0
    %1951 = vmatprep.subr.mxu0 0.0
    %1952 = vmatpush1.msra.mxu0 %v1891
    %1953 = vmatprep.subr.mxu0 0.0
    %1954 = vmatpush1.msra.mxu0 %v1892
    %1955 = vmatprep.subr.mxu0 0.0
    %1956 = vmatpush1.msra.mxu0 %v1893
    %1957 = vmatprep.subr.mxu0 0.0
    %1958 = vmatpush1.msra.mxu0 %v1894
    %1959 = vmatprep.subr.mxu0 0.0
    %1960 = vmatpush1.msra.mxu0 0.0
    %1961 = vmatprep.subr.mxu0 0.0
    %1962 = vmatpush1.msra.mxu0 0.0
    %1963 = vmatprep.subr.mxu0 0.0
    %1964 = vmatpush1.msra.mxu0 0.0
    %1965 = vmatprep.subr.mxu0 0.0
    %1966 = vmatpush1.msra.mxu0 0.0
    %1967 = vmatprep.subr.mxu0 0.0
    %1968 = vmatpush1.msra.mxu0 0.0
    %1969 = vmatprep.subr.mxu0 0.0
    %1970 = vmatpush1.msra.mxu0 0.0
    %1971 = vmatprep.subr.mxu0 0.0
    %1972 = vmatpush1.msra.mxu0 0.0
    %1973 = vmatprep.subr.mxu0 0.0
    %1974 = vmatpush1.msra.mxu0 0.0
    %1975 = vmatprep.subr.mxu0 0.0
    %1976 = vmatpush1.msra.mxu0 0.0
    %1977 = vmatprep.subr.mxu0 0.0
    %1978 = vmatpush1.msra.mxu0 0.0
    %1979 = vmatprep.subr.mxu0 0.0
    %1980 = vmatpush1.msra.mxu0 0.0
    %1981 = vmatprep.subr.mxu0 0.0
    %1982 = vmatpush1.msra.mxu0 0.0
    %1983 = vmatprep.subr.mxu0 0.0
    %1984 = vmatpush1.msra.mxu0 0.0
    %1985 = vmatprep.subr.mxu0 0.0
    %1986 = vmatpush1.msra.mxu0 0.0
    %1987 = vmatprep.subr.mxu0 0.0
    %1988 = vmatpush1.msra.mxu0 0.0
    %1989 = vmatprep.subr.mxu0 0.0
    %1990 = vmatpush1.msra.mxu0 0.0
    %1991 = vmatprep.subr.mxu0 0.0
    %1992 = vmatpush1.msra.mxu0 0.0
    %1993 = vmatprep.subr.mxu0 0.0
    %1994 = vmatpush1.msra.mxu0 0.0
    %1995 = vmatprep.subr.mxu0 0.0
    %1996 = vmatpush1.msra.mxu0 0.0
    %1997 = vmatprep.subr.mxu0 0.0
    %1998 = vmatpush1.msra.mxu0 0.0
    %1999 = vmatprep.subr.mxu0 0.0
    %2000 = vmatpush1.msra.mxu0 0.0
    %2001 = vmatprep.subr.mxu0 0.0
    %2002 = vmatpush1.msra.mxu0 0.0
    %2003 = vmatprep.subr.mxu0 0.0
    %2004 = vmatpush1.msra.mxu0 0.0
    %2005 = vmatprep.subr.mxu0 0.0
    %2006 = vmatpush1.msra.mxu0 0.0
    %2007 = vmatprep.subr.mxu0 0.0
    %2008 = vmatpush1.msra.mxu0 0.0
    %2009 = vmatprep.subr.mxu0 0.0
    %2010 = vmatpush1.msra.mxu0 0.0
    %2011 = vmatprep.subr.mxu0 0.0
    %2012 = vmatpush1.msra.mxu0 0.0
    %2013 = vmatprep.subr.mxu0 0.0
    %2014 = vmatpush1.msra.mxu0 0.0
    %2015 = vmatprep.mubr.f32.mxu0 0.0
    %2016 = vmatmul.mubr.f32.gmra.mrb[0].mxu0 %v1904
    %v2017 = vpop.f32.mrb[0].mxu0
    %v2018 = vadd.f32 %v1900, %v2017
    %v2019 = vpop.f32.mrb[0].mxu0
    %2020 = vmatprep.mubr.f32.mxu0 0.0
    %2021 = vmatmul.mubr.f32.gmra.mrb[0].mxu0 %v1907
    %v2022 = vpop.f32.mrb[0].mxu0
    %v2023 = vadd.f32 %v1900, %v2022
    %v2024 = vpop.f32.mrb[0].mxu0
    %2025 = vmatprep.mubr.f32.mxu0 0.0
    %2026 = vmatmul.mubr.f32.gmra.mrb[0].mxu0 %v1910
    %v2027 = vpop.f32.mrb[0].mxu0
    %v2028 = vadd.f32 %v1900, %v2027
    %v2029 = vpop.f32.mrb[0].mxu0
    %2030 = vmatprep.mubr.f32.mxu0 0.0
    %2031 = vmatmul.mubr.f32.gmra.mrb[0].mxu0 %v1913
    %v2032 = vpop.f32.mrb[0].mxu0
    %v2033 = vadd.f32 %v1900, %v2032
    %v2034 = vpop.f32.mrb[0].mxu0
    %2035 = vmatprep.mubr.f32.mxu0 0.0
    %2036 = vmatmul.mubr.f32.gmra.mrb[0].mxu0 %v1916
    %v2037 = vpop.f32.mrb[0].mxu0
    %v2038 = vadd.f32 %v1900, %v2037
    %v2039 = vpop.f32.mrb[0].mxu0
    %2040 = vmatprep.mubr.f32.mxu0 0.0
    %2041 = vmatmul.mubr.f32.gmra.mrb[0].mxu0 %v1919
    %v2042 = vpop.f32.mrb[0].mxu0
    %v2043 = vadd.f32 %v1900, %v2042
    %v2044 = vpop.f32.mrb[0].mxu0
    %2045 = vmatprep.mubr.f32.mxu0 0.0
    %2046 = vmatmul.mubr.f32.gmra.mrb[0].mxu0 %v1922
    %v2047 = vpop.f32.mrb[0].mxu0
    %v2048 = vadd.f32 %v1900, %v2047
    %v2049 = vpop.f32.mrb[0].mxu0
    %2050 = vmatprep.mubr.f32.mxu0 0.0
    %2051 = vmatmul.mubr.f32.gmra.mrb[0].mxu0 %v1925
    %v2052 = vpop.f32.mrb[0].mxu0
    %v2053 = vadd.f32 %v1900, %v2052
    %v2054 = vpop.f32.mrb[0].mxu0
    %2055 = vmatprep.mubr.f32.mxu0 0.0
    %2056 = vmatmul.mubr.f32.gmra.mrb[0].mxu0 %v1928
    %v2057 = vpop.f32.mrb[0].mxu0
    %v2058 = vadd.f32 %v1900, %v2057
    %v2059 = vpop.f32.mrb[0].mxu0
    %2060 = vmatprep.mubr.f32.mxu0 0.0
    %2061 = vmatmul.mubr.f32.gmra.mrb[0].mxu0 %v1931
    %v2062 = vpop.f32.mrb[0].mxu0
    %v2063 = vadd.f32 %v1900, %v2062
    %v2064 = vpop.f32.mrb[0].mxu0
    %2065 = vmatprep.mubr.f32.mxu0 0.0
    %2066 = vmatmul.mubr.f32.gmra.mrb[0].mxu0 %v1934
    %v2067 = vpop.f32.mrb[0].mxu0
    %v2068 = vadd.f32 %v1900, %v2067
    %v2069 = vpop.f32.mrb[0].mxu0
    %2070 = vmatprep.mubr.f32.mxu0 0.0
    %2071 = vmatmul.mubr.f32.gmra.mrb[0].mxu0 %v1937
    %v2072 = vpop.f32.mrb[0].mxu0
    %v2073 = vadd.f32 %v1900, %v2072
    %v2074 = vpop.f32.mrb[0].mxu0
    %2075 = vmatprep.mubr.f32.mxu0 0.0
    %2076 = vmatmul.mubr.f32.gmra.mrb[0].mxu0 %v1940
    %v2077 = vpop.f32.mrb[0].mxu0
    %v2078 = vadd.f32 %v1900, %v2077
    %v2079 = vpop.f32.mrb[0].mxu0
    %2080 = vmatprep.mubr.f32.mxu0 0.0
    %2081 = vmatmul.mubr.f32.gmra.mrb[0].mxu0 %v1943
    %v2082 = vpop.f32.mrb[0].mxu0
    %v2083 = vadd.f32 %v1900, %v2082
    %v2084 = vpop.f32.mrb[0].mxu0
    %2085 = vmatprep.mubr.f32.mxu0 0.0
    %2086 = vmatmul.mubr.f32.gmra.mrb[0].mxu0 %v1946
    %v2087 = vpop.f32.mrb[0].mxu0
    %v2088 = vadd.f32 %v1900, %v2087
    %v2089 = vpop.f32.mrb[0].mxu0
    %2090 = vmatprep.mubr.f32.mxu0 0.0
    %2091 = vmatmul.mubr.f32.gmra.mrb[0].mxu0 %v1949
    %v2092 = vpop.f32.mrb[0].mxu0
    %v2093 = vadd.f32 %v1900, %v2092
    %v2094 = vpop.f32.mrb[0].mxu0
    %2095 = vdwg.mxu0
    %v2096 = vmul.f32 %v2018, %v2018
    %v2097 = vmul.f32 %v2023, %v2023
    %v2098 = vmul.f32 %v2028, %v2028
    %v2099 = vmul.f32 %v2033, %v2033
    %v2100 = vmul.f32 %v2038, %v2038
    %v2101 = vmul.f32 %v2043, %v2043
    %v2102 = vmul.f32 %v2048, %v2048
    %v2103 = vmul.f32 %v2053, %v2053
    %v2104 = vmul.f32 %v2058, %v2058
    %v2105 = vmul.f32 %v2063, %v2063
    %v2106 = vmul.f32 %v2068, %v2068
    %v2107 = vmul.f32 %v2073, %v2073
    %v2108 = vmul.f32 %v2078, %v2078
    %v2109 = vmul.f32 %v2083, %v2083
    %v2110 = vmul.f32 %v2088, %v2088
    %v2111 = vmul.f32 %v2093, %v2093
    %2112 = vadd.xlane.f32.xlu0 %v2096
    %v2113 = vpop.xlane.xlu0 %2112
    %2114 = vadd.xlane.f32.xlu0 %v2097
    %v2115 = vpop.xlane.xlu0 %2114
    %2116 = vadd.xlane.f32.xlu0 %v2098
    %v2117 = vpop.xlane.xlu0 %2116
    %2118 = vadd.xlane.f32.xlu0 %v2099
    %v2119 = vpop.xlane.xlu0 %2118
    %2120 = vadd.xlane.f32.xlu0 %v2100
    %v2121 = vpop.xlane.xlu0 %2120
    %2122 = vadd.xlane.f32.xlu0 %v2101
    %v2123 = vpop.xlane.xlu0 %2122
    %2124 = vadd.xlane.f32.xlu0 %v2102
    %v2125 = vpop.xlane.xlu0 %2124
    %2126 = vadd.xlane.f32.xlu0 %v2103
    %v2127 = vpop.xlane.xlu0 %2126
    %2128 = vadd.xlane.f32.xlu0 %v2104
    %v2129 = vpop.xlane.xlu0 %2128
    %2130 = vadd.xlane.f32.xlu0 %v2105
    %v2131 = vpop.xlane.xlu0 %2130
    %2132 = vadd.xlane.f32.xlu0 %v2106
    %v2133 = vpop.xlane.xlu0 %2132
    %2134 = vadd.xlane.f32.xlu0 %v2107
    %v2135 = vpop.xlane.xlu0 %2134
    %2136 = vadd.xlane.f32.xlu0 %v2108
    %v2137 = vpop.xlane.xlu0 %2136
    %2138 = vadd.xlane.f32.xlu0 %v2109
    %v2139 = vpop.xlane.xlu0 %2138
    %2140 = vadd.xlane.f32.xlu0 %v2110
    %v2141 = vpop.xlane.xlu0 %2140
    %2142 = vadd.xlane.f32.xlu0 %v2111
    %v2143 = vpop.xlane.xlu0 %2142
    %v2144 = vmax.f32 %v2113, 1e-24
    %v2145 = vmax.f32 %v2115, 1e-24
    %v2146 = vmax.f32 %v2117, 1e-24
    %v2147 = vmax.f32 %v2119, 1e-24
    %v2148 = vmax.f32 %v2121, 1e-24
    %v2149 = vmax.f32 %v2123, 1e-24
    %v2150 = vmax.f32 %v2125, 1e-24
    %v2151 = vmax.f32 %v2127, 1e-24
    %v2152 = vmax.f32 %v2129, 1e-24
    %v2153 = vmax.f32 %v2131, 1e-24
    %v2154 = vmax.f32 %v2133, 1e-24
    %v2155 = vmax.f32 %v2135, 1e-24
    %v2156 = vmax.f32 %v2137, 1e-24
    %v2157 = vmax.f32 %v2139, 1e-24
    %v2158 = vmax.f32 %v2141, 1e-24
    %v2159 = vmax.f32 %v2143, 1e-24
    %v2160 = vrsqrt.pop %v2144
    %v2161 = vrsqrt.pop %v2145
    %v2162 = vrsqrt.pop %v2146
    %v2163 = vrsqrt.pop %v2147
    %v2164 = vrsqrt.pop %v2148
    %v2165 = vrsqrt.pop %v2149
    %v2166 = vrsqrt.pop %v2150
    %v2167 = vrsqrt.pop %v2151
    %v2168 = vrsqrt.pop %v2152
    %v2169 = vrsqrt.pop %v2153
    %v2170 = vrsqrt.pop %v2154
    %v2171 = vrsqrt.pop %v2155
    %v2172 = vrsqrt.pop %v2156
    %v2173 = vrsqrt.pop %v2157
    %v2174 = vrsqrt.pop %v2158
    %v2175 = vrsqrt.pop %v2159
    %v2176 = vmul.f32 %v2018, %v2160
    %v2177 = vmul.f32 %v2023, %v2161
    %v2178 = vmul.f32 %v2028, %v2162
    %v2179 = vmul.f32 %v2033, %v2163
    %v2180 = vmul.f32 %v2038, %v2164
    %v2181 = vmul.f32 %v2043, %v2165
    %v2182 = vmul.f32 %v2048, %v2166
    %v2183 = vmul.f32 %v2053, %v2167
    %v2184 = vmul.f32 %v2058, %v2168
    %v2185 = vmul.f32 %v2063, %v2169
    %v2186 = vmul.f32 %v2068, %v2170
    %v2187 = vmul.f32 %v2073, %v2171
    %v2188 = vmul.f32 %v2078, %v2172
    %v2189 = vmul.f32 %v2083, %v2173
    %v2190 = vmul.f32 %v2088, %v2174
    %v2191 = vmul.f32 %v2093, %v2175
    %2192 = vst [vmem:[#allocation2] sm:$0xff] %v2176
    %2193 = vst [vmem:[#allocation2 + $0x8] sm:$0xff] %v2177
    %2194 = vst [vmem:[#allocation2 + $0x10] sm:$0xff] %v2178
    %2195 = vst [vmem:[#allocation2 + $0x18] sm:$0xff] %v2179
    %2196 = vst [vmem:[#allocation2 + $0x20] sm:$0xff] %v2180
    %2197 = vst [vmem:[#allocation2 + $0x28] sm:$0xff] %v2181
    %2198 = vst [vmem:[#allocation2 + $0x30] sm:$0xff] %v2182
    %2199 = vst [vmem:[#allocation2 + $0x38] sm:$0xff] %v2183
    %2200 = vst [vmem:[#allocation2 + $0x40] sm:$0xff] %v2184
    %2201 = vst [vmem:[#allocation2 + $0x48] sm:$0xff] %v2185
    %2202 = vst [vmem:[#allocation2 + $0x50] sm:$0xff] %v2186
    %2203 = vst [vmem:[#allocation2 + $0x58] sm:$0xff] %v2187
    %2204 = vst [vmem:[#allocation2 + $0x60] sm:$0xff] %v2188
    %2205 = vst [vmem:[#allocation2 + $0x68] sm:$0xff] %v2189
    %2206 = vst [vmem:[#allocation2 + $0x70] sm:$0xff] %v2190
    %2207 = vst [vmem:[#allocation2 + $0x78] sm:$0xff] %v2191
    // Predicated region
    $region22: #{tpu_custom_call.1} parent=1 // pred_check
      _
    $region23: #{tpu_custom_call.1} parent=1 // pred_check_branch
      %2209 = sbr.rel (0) target = $region25
    $region24: #{tpu_custom_call.1} parent=1 // pred_region
      %s2211 = ssub.s32 2048, 2048
      %2212 = vsyncadd [#allocation3], %s2211
      %s2213 = sshll.u32 [#allocation2], 4
      %s2214 = int_to_ptr.vmem [resolvable:$true] %s2213
      %2219 = dma.vmem_to_hbm [thread:$0]  %s2214, 2048, %s5, [#allocation3], 128, 128, 8
    $region25: #{tpu_custom_call.1} parent=1 // pred_fallthru
      _
    // Predicated region
    $region26: #{tpu_custom_call.1} parent=1 // pred_check
      _
    $region27: #{tpu_custom_call.1} parent=1 // pred_check_branch
      %2221 = sbr.rel (0) target = $region29
    $region28: #{tpu_custom_call.1} parent=1 // pred_region
      %2222 = dma.done [#allocation3], 2048
    $region29: #{tpu_custom_call.1} parent=1 // pred_fallthru
      _
    %2223 = vsyncpa [#allocation3], 1

</llo_original>
